<compile_context>
chip_gen: v7x
topology: tpu7x:2x2x1
jax: 0.10.0
libtpu: 0.0.40
codegen_flags: <defaults>
</compile_context>

<pallas_src>
import functools
import math

import jax
import jax.numpy as jnp
from jax.experimental import pallas as pl
from jax.experimental.pallas import tpu as pltpu

LANE = 128
VMEM_LIMIT_BYTES = 32 * 1024 * 1024  # safe scoped-VMEM request on v5e/v6e/v7x


def _round_up(x, m):
    return (x + m - 1) // m * m


def _pow2_tile(requested, cap):
    """Largest power-of-two multiple of 128 that is <= min(requested, cap)."""
    limit = max(LANE, min(requested, cap))
    t = LANE
    while t * 2 <= limit:
        t *= 2
    return t


def _vmem_capacity_bytes():
    try:
        return pltpu.get_tpu_info().vmem_capacity_bytes
    except Exception:
        return 64 * 1024 * 1024  # v7x floor (v5e/v6e have 128 MiB)


# ----------------------------- Pallas kernels ---------------------------------
def lin1_kernel(alpha, x_ref, w1_ref, b1_ref, h_ref, ax0_ref):
    """h = relu(x @ W1 + b1); also emit alpha*x0 once (hoisted out of the conv loop)."""
    h = jnp.dot(x_ref[...], w1_ref[...], preferred_element_type=jnp.float32) + b1_ref[...]
    h = jnp.maximum(h, 0.0)
    h_ref[...] = h.astype(h_ref.dtype)   # carried activation stored in bf16
    ax0_ref[...] = alpha * h             # alpha*x0 kept f32 for the combine


def prop_stream_kernel(alpha, a_ref, h_ref, ax0_ref, weff_ref, out_ref, acc_ref):
    """One GCN2Conv layer, tiled over (row_tile, k_tile):

       acc  += A_hat[i,k] @ h[k]                (bf16 MXU operands, f32 accumulate)
       at last k:
           s = (1-alpha)*acc + alpha*x0[i]      (alpha*x0 precomputed, f32)
           out[i] = relu(s @ W_eff)             (W_eff = (1-beta)I + beta*Wc, bf16)
    """
    k = pl.program_id(1)

    @pl.when(k == 0)
    def _():
        acc_ref[...] = jnp.zeros_like(acc_ref)

    acc_ref[...] += jnp.dot(a_ref[...], h_ref[...],
                            preferred_element_type=jnp.float32)

    @pl.when(k == pl.num_programs(1) - 1)
    def _():
        s = (1.0 - alpha) * acc_ref[...] + ax0_ref[...]
        out_ref[...] = jnp.maximum(
            jnp.dot(s.astype(jnp.bfloat16), weff_ref[...],
                    preferred_element_type=jnp.float32),
            0.0).astype(out_ref.dtype)


def prop_resident_kernel(alpha, a_ref, h_ref, ax0_ref, weff_ref, out_ref):
    """Same layer, with the whole h pinned resident in VMEM (read once per layer)."""
    acc = jnp.dot(a_ref[...], h_ref[...], preferred_element_type=jnp.float32)
    s = (1.0 - alpha) * acc + ax0_ref[...]
    out_ref[...] = jnp.maximum(
        jnp.dot(s.astype(jnp.bfloat16), weff_ref[...],
                preferred_element_type=jnp.float32),
        0.0).astype(out_ref.dtype)


def head_kernel(pool_ref, h_ref, w2_ref, b2_ref, w3_ref, b3_ref, out_ref, p_acc):
    """global mean pool tiled over nodes (f32 accumulator) -> lin2+relu -> lin3."""
    k = pl.program_id(0)

    @pl.when(k == 0)
    def _():
        p_acc[...] = jnp.zeros_like(p_acc)

    p_acc[...] += jnp.dot(pool_ref[...], h_ref[...].astype(jnp.float32),
                          preferred_element_type=jnp.float32)

    @pl.when(k == pl.num_programs(0) - 1)
    def _():
        z = jnp.maximum(
            jnp.dot(p_acc[...], w2_ref[...], preferred_element_type=jnp.float32)
            + b2_ref[...], 0.0)
        out_ref[...] = jnp.dot(z, w3_ref[...],
                               preferred_element_type=jnp.float32) + b3_ref[...]


# ----------------------------- wrapper -----------------------------------------
def gcnii_forward_pallas(x, a_hat, pool_mat, params, *, num_conv, alpha, theta,
                         tile_m=512, tile_k=512, force_stream=False):
    N, fin = x.shape
    conv_h = params["w1"].shape[1]
    lin_h = params["w2"].shape[1]
    ncls = params["w3"].shape[1]
    G = pool_mat.shape[0]

    # --- tile selection (power-of-two multiples of 128, clamped to the graph) ---
    n128 = _round_up(N, LANE)
    tile_k = _pow2_tile(tile_k, n128)
    tile_m = _pow2_tile(tile_m, n128)
    # v7x megacore: keep the row ("parallel") grid axis >= 2 whenever possible.
    while True:
        n_p = _round_up(N, max(tile_m, tile_k))
        if tile_m == LANE or n_p // tile_m >= 2:
            break
        tile_m //= 2

    fin_p = _round_up(fin, LANE)
    ch_p = _round_up(conv_h, LANE)
    lh_p = _round_up(lin_h, LANE)
    nc_p = _round_up(ncls, LANE)
    g_p = _round_up(max(G, 8), 8)

    f32, bf16 = jnp.float32, jnp.bfloat16

    x_p = jnp.zeros((n_p, fin_p), f32).at[:N, :fin].set(x)
    # Padded adjacency built directly in bf16 (no transient f32 N^2 copy in HBM).
    a_p = jnp.zeros((n_p, n_p), bf16).at[:N, :N].set(a_hat.astype(bf16))
    pool_p = jnp.zeros((g_p, n_p), f32).at[:G, :N].set(pool_mat)

    w1 = jnp.zeros((fin_p, ch_p), f32).at[:fin, :conv_h].set(params["w1"])
    b1 = jnp.zeros((1, ch_p), f32).at[:, :conv_h].set(params["b1"])
    w2 = jnp.zeros((ch_p, lh_p), f32).at[:conv_h, :lin_h].set(params["w2"])
    b2 = jnp.zeros((1, lh_p), f32).at[:, :lin_h].set(params["b2"])
    w3 = jnp.zeros((lh_p, nc_p), f32).at[:lin_h, :ncls].set(params["w3"])
    b3 = jnp.zeros((1, nc_p), f32).at[:, :ncls].set(params["b3"])

    # Fold the per-layer beta blend into a single effective weight (betas are static);
    # store in bf16 for the MXU epilogue (v5e has no fast f32 matmul path).
    eye = jnp.eye(ch_p, dtype=f32)
    weffs = []
    for layer in range(num_conv):
        beta = math.log(theta / (layer + 1) + 1.0)
        wc = jnp.zeros((ch_p, ch_p), f32).at[:conv_h, :conv_h].set(params["cw"][layer])
        weffs.append(((1.0 - beta) * eye + beta * wc).astype(bf16))

    # ---- lin1 + relu (bf16 h), and alpha*x0 (f32), row-tiled / fully parallel ----
    h, ax0 = pl.pallas_call(
        functools.partial(lin1_kernel, alpha),
        out_shape=(jax.ShapeDtypeStruct((n_p, ch_p), bf16),
                   jax.ShapeDtypeStruct((n_p, ch_p), f32)),
        grid_spec=pltpu.PrefetchScalarGridSpec(
            num_scalar_prefetch=0,
            grid=(n_p // tile_m,),
            in_specs=[pl.BlockSpec((tile_m, fin_p), lambda i: (i, 0)),
                      pl.BlockSpec((fin_p, ch_p), lambda i: (0, 0)),
                      pl.BlockSpec((1, ch_p), lambda i: (0, 0))],
            out_specs=[pl.BlockSpec((tile_m, ch_p), lambda i: (i, 0)),
                       pl.BlockSpec((tile_m, ch_p), lambda i: (i, 0))]),
        compiler_params=pltpu.CompilerParams(
            dimension_semantics=("parallel",),
            vmem_limit_bytes=VMEM_LIMIT_BYTES),
    )(x_p, w1, b1)

    # ---- decide resident-h vs streamed-h for the conv layers (VMEM-gated) ----
    vmem_budget = min(_vmem_capacity_bytes() // 4, VMEM_LIMIT_BYTES - 8 * 1024 * 1024)
    resident_bytes = (2 * tile_m * n_p * 2            # A row stripe, double buffered (bf16)
                      + 2 * n_p * ch_p * 2            # resident h (bf16)
                      + 2 * tile_m * ch_p * (4 + 2)   # ax0 (f32) + out (bf16) buffers
                      + 2 * ch_p * ch_p * 2)          # W_eff (bf16)
    use_resident = (not force_stream) and resident_bytes <= vmem_budget

    if use_resident:
        # h read once from HBM per layer; full-row contraction per grid step.
        prop = pl.pallas_call(
            functools.partial(prop_resident_kernel, alpha),
            out_shape=jax.ShapeDtypeStruct((n_p, ch_p), bf16),
            grid_spec=pltpu.PrefetchScalarGridSpec(
                num_scalar_prefetch=0,
                grid=(n_p // tile_m,),
                in_specs=[pl.BlockSpec((tile_m, n_p), lambda i: (i, 0)),
                          pl.BlockSpec((n_p, ch_p), lambda i: (0, 0)),
                          pl.BlockSpec((tile_m, ch_p), lambda i: (i, 0)),
                          pl.BlockSpec((ch_p, ch_p), lambda i: (0, 0))],
                out_specs=pl.BlockSpec((tile_m, ch_p), lambda i: (i, 0))),
            compiler_params=pltpu.CompilerParams(
                dimension_semantics=("parallel",),
                vmem_limit_bytes=VMEM_LIMIT_BYTES),
        )
    else:
        prop = pl.pallas_call(
            functools.partial(prop_stream_kernel, alpha),
            out_shape=jax.ShapeDtypeStruct((n_p, ch_p), bf16),
            grid_spec=pltpu.PrefetchScalarGridSpec(
                num_scalar_prefetch=0,
                grid=(n_p // tile_m, n_p // tile_k),
                in_specs=[pl.BlockSpec((tile_m, tile_k), lambda i, k: (i, k)),
                          pl.BlockSpec((tile_k, ch_p), lambda i, k: (k, 0)),
                          pl.BlockSpec((tile_m, ch_p), lambda i, k: (i, 0)),
                          pl.BlockSpec((ch_p, ch_p), lambda i, k: (0, 0))],
                out_specs=pl.BlockSpec((tile_m, ch_p), lambda i, k: (i, 0)),
                scratch_shapes=[pltpu.VMEM((tile_m, ch_p), jnp.float32)]),
            compiler_params=pltpu.CompilerParams(
                dimension_semantics=("parallel", "arbitrary"),
                vmem_limit_bytes=VMEM_LIMIT_BYTES),
        )

    for layer in range(num_conv):
        h = prop(a_p, h, ax0, weffs[layer])

    # ---- pooling + MLP head, tiled over nodes with an f32 accumulator ----
    head_tile = min(tile_k, n_p)
    out_p = pl.pallas_call(
        head_kernel,
        out_shape=jax.ShapeDtypeStruct((g_p, nc_p), f32),
        grid_spec=pltpu.PrefetchScalarGridSpec(
            num_scalar_prefetch=0,
            grid=(n_p // head_tile,),
            in_specs=[pl.BlockSpec((g_p, head_tile), lambda k: (0, k)),
                      pl.BlockSpec((head_tile, ch_p), lambda k: (k, 0)),
                      pl.BlockSpec((ch_p, lh_p), lambda k: (0, 0)),
                      pl.BlockSpec((1, lh_p), lambda k: (0, 0)),
                      pl.BlockSpec((lh_p, nc_p), lambda k: (0, 0)),
                      pl.BlockSpec((1, nc_p), lambda k: (0, 0))],
            out_specs=pl.BlockSpec((g_p, nc_p), lambda k: (0, 0)),
            scratch_shapes=[pltpu.VMEM((g_p, ch_p), jnp.float32)]),
        compiler_params=pltpu.CompilerParams(
            dimension_semantics=("arbitrary",),
            vmem_limit_bytes=VMEM_LIMIT_BYTES),
    )(pool_p, h, w2, b2, w3, b3)

    return out_p[:G, :ncls]


# ----------------------------- JAX glue ---------------------------------------
def build_normalized_adjacency(edge_index, num_nodes):
    """Dense gcn_norm with self loops: A_hat = D^-1/2 (A + I) D^-1/2."""
    src, dst = edge_index[0], edge_index[1]
    a = jnp.zeros((num_nodes, num_nodes), jnp.float32).at[dst, src].add(1.0)
    a = a + jnp.eye(num_nodes, dtype=jnp.float32)
    deg = a.sum(axis=1)
    dinv = jnp.where(deg > 0, 1.0 / jnp.sqrt(deg), 0.0)
    return dinv[:, None] * a * dinv[None, :]


def build_mean_pool_matrix(batch, num_graphs, num_nodes):
    onehot = (batch[None, :] == jnp.arange(num_graphs)[:, None]).astype(jnp.float32)
    counts = onehot.sum(axis=1, keepdims=True)
    return onehot / jnp.maximum(counts, 1.0)


def init_params(key, num_node_features, conv_h, lin_h, num_classes, num_conv):
    ks = jax.random.split(key, 8)

    def lin(kw, fan_in, fan_out):
        bound = 1.0 / math.sqrt(fan_in)
        w = jax.random.uniform(kw, (fan_in, fan_out), jnp.float32, -bound, bound)
        b = jnp.zeros((1, fan_out), jnp.float32)
        return w, b

    w1, b1 = lin(ks[0], num_node_features, conv_h)
    w2, b2 = lin(ks[1], conv_h, lin_h)
    w3, b3 = lin(ks[2], lin_h, num_classes)
    glorot = math.sqrt(6.0 / (conv_h + conv_h))
    cw = jax.random.uniform(ks[3], (num_conv, conv_h, conv_h), jnp.float32, -glorot, glorot)
    return {"w1": w1, "b1": b1, "w2": w2, "b2": b2, "w3": w3, "b3": b3, "cw": cw}


def gcnii_reference(x, a_hat, pool_mat, params, *, num_conv, alpha, theta):
    h = jnp.maximum(x @ params["w1"] + params["b1"], 0.0)
    x0 = h
    for layer in range(num_conv):
        beta = math.log(theta / (layer + 1) + 1.0)
        s = (1.0 - alpha) * (a_hat @ h) + alpha * x0
        h = jnp.maximum((1.0 - beta) * s + beta * (s @ params["cw"][layer]), 0.0)
    p = pool_mat @ h
    z = jnp.maximum(p @ params["w2"] + params["b2"], 0.0)
    return z @ params["w3"] + params["b3"]


# ----------------------------- main -------------------------------------------
if __name__ == "__main__":
    # Config (mirrors GCNII(num_node_features, [conv_h, lin_h], num_classes))
    num_node_features = 16
    conv_h, lin_h = 32, 32
    num_classes = 4
    num_conv = 3
    alpha, theta = 0.5, 0.1

    num_graphs = 2
    nodes_per_graph = 96           # N=192 -> padded to 256
    num_nodes = num_graphs * nodes_per_graph

    key = jax.random.PRNGKey(0)
    k_x, k_e, k_p = jax.random.split(key, 3)

    # Node features
    x = jax.random.normal(k_x, (num_nodes, num_node_features), jnp.float32)

    # Random undirected edges within each graph
    edges_per_graph = 128
    srcs, dsts = [], []
    ek = k_e
    for g in range(num_graphs):
        ek, k1, k2 = jax.random.split(ek, 3)
        s = jax.random.randint(k1, (edges_per_graph,), 0, nodes_per_graph) + g * nodes_per_graph
        d = jax.random.randint(k2, (edges_per_graph,), 0, nodes_per_graph) + g * nodes_per_graph
        srcs.append(jnp.concatenate([s, d]))
        dsts.append(jnp.concatenate([d, s]))
    edge_index = jnp.stack([jnp.concatenate(srcs), jnp.concatenate(dsts)], axis=0)

    # Graph membership of each node
    batch = jnp.repeat(jnp.arange(num_graphs), nodes_per_graph)

    # Dense helpers (glue)
    a_hat = build_normalized_adjacency(edge_index, num_nodes)
    pool_mat = build_mean_pool_matrix(batch, num_graphs, num_nodes)

    params = init_params(k_p, num_node_features, conv_h, lin_h, num_classes, num_conv)

    ref = gcnii_reference(x, a_hat, pool_mat, params,
                          num_conv=num_conv, alpha=alpha, theta=theta)

    # Default config: large tiles, resident-h path for this small graph.
    fwd = jax.jit(functools.partial(
        gcnii_forward_pallas, num_conv=num_conv, alpha=alpha, theta=theta))
    out = jax.block_until_ready(fwd(x, a_hat, pool_mat, params))
    assert out.shape == (num_graphs, num_classes), out.shape
    # bf16 adjacency / h / W_eff MXU operands -> modest tolerance vs f32 reference.
    assert jnp.allclose(out, ref, atol=5e-2, rtol=5e-2), (out, ref)

    # Also exercise the streamed k-reduction path (used for large graphs).
    fwd_stream = jax.jit(functools.partial(
        gcnii_forward_pallas, num_conv=num_conv, alpha=alpha, theta=theta,
        tile_m=128, tile_k=128, force_stream=True))
    out_s = jax.block_until_ready(fwd_stream(x, a_hat, pool_mat, params))
    assert jnp.allclose(out_s, ref, atol=5e-2, rtol=5e-2), (out_s, ref)

    print("KERNEL_OK")
</pallas_src>

<mosaic_0001>
module attributes {stable_mosaic.version = 11 : i64} {
  func.func @lin1_kernel(%arg0: i32, %arg1: memref<128x128xf32, #tpu.memory_space<vmem>>, %arg2: memref<128x128xf32, #tpu.memory_space<vmem>>, %arg3: memref<1x128xf32, #tpu.memory_space<vmem>>, %arg4: memref<128x128xbf16, #tpu.memory_space<vmem>>, %arg5: memref<128x128xf32, #tpu.memory_space<vmem>>) attributes {dimension_semantics = [#tpu.dimension_semantics<parallel>], iteration_bounds = array<i64: 2>, scalar_prefetch = 0 : i64, scratch_operands = 0 : i64, tpu.core_type = #tpu.core_type<tc>, window_params = [{transform_indices = @transform_0, window_bounds = array<i64: 128, 128>}, {pipeline_mode = #tpu.pipeline_mode<synchronous>, transform_indices = @transform_1, window_bounds = array<i64: 128, 128>}, {pipeline_mode = #tpu.pipeline_mode<synchronous>, transform_indices = @transform_2, window_bounds = array<i64: 1, 128>}, {transform_indices = @transform_3, window_bounds = array<i64: 128, 128>}, {transform_indices = @transform_4, window_bounds = array<i64: 128, 128>}]} {
    %c0 = arith.constant 0 : index
    %c0_0 = arith.constant 0 : index
    %0 = vector.load %arg1[%c0, %c0_0] : memref<128x128xf32, #tpu.memory_space<vmem>>, vector<128x128xf32>
    %c0_1 = arith.constant 0 : index
    %c0_2 = arith.constant 0 : index
    %1 = vector.load %arg2[%c0_1, %c0_2] : memref<128x128xf32, #tpu.memory_space<vmem>>, vector<128x128xf32>
    %cst = arith.constant dense<0.000000e+00> : vector<128x128xf32>
    %2 = tpu.matmul %0, %1, %cst {dimension_numbers = #tpu.dot_dimension_numbers<[1], [0], [0], [1], [0, 0, 1, 1], [], []>} : vector<128x128xf32>, vector<128x128xf32>, vector<128x128xf32> -> vector<128x128xf32>
    %c0_3 = arith.constant 0 : index
    %c0_4 = arith.constant 0 : index
    %3 = vector.load %arg3[%c0_3, %c0_4] : memref<1x128xf32, #tpu.memory_space<vmem>>, vector<1x128xf32>
    %4 = vector.broadcast %3 : vector<1x128xf32> to vector<128x128xf32>
    %5 = arith.addf %2, %4 : vector<128x128xf32>
    %cst_5 = arith.constant 0.000000e+00 : f32
    %6 = vector.broadcast %cst_5 : f32 to vector<128x128xf32>
    %7 = arith.maximumf %5, %6 : vector<128x128xf32>
    %8 = arith.truncf %7 : vector<128x128xf32> to vector<128x128xbf16>
    %c0_6 = arith.constant 0 : index
    %c0_7 = arith.constant 0 : index
    %9 = vector.load %arg4[%c0_6, %c0_7] : memref<128x128xbf16, #tpu.memory_space<vmem>>, vector<128x128xbf16>
    tpu.vector_store %arg4[%c0_6, %c0_7], %8 {strides = array<i32>} : memref<128x128xbf16, #tpu.memory_space<vmem>>, vector<128x128xbf16>,
    %cst_8 = arith.constant 5.000000e-01 : f32
    %10 = vector.broadcast %cst_8 : f32 to vector<128x128xf32>
    %11 = arith.mulf %10, %7 : vector<128x128xf32>
    %c0_9 = arith.constant 0 : index
    %c0_10 = arith.constant 0 : index
    %12 = vector.load %arg5[%c0_9, %c0_10] : memref<128x128xf32, #tpu.memory_space<vmem>>, vector<128x128xf32>
    tpu.vector_store %arg5[%c0_9, %c0_10], %11 {strides = array<i32>} : memref<128x128xf32, #tpu.memory_space<vmem>>, vector<128x128xf32>,
    return
  }
  func.func @transform_0(%arg0: i32) -> (i32, i32) {
    %c0_i32 = arith.constant 0 : i32
    %c0_i32_0 = arith.constant 0 : i32
    return %arg0, %c0_i32 : i32, i32
  }
  func.func @transform_1(%arg0: i32) -> (i32, i32) {
    %c0_i32 = arith.constant 0 : i32
    %c0_i32_0 = arith.constant 0 : i32
    %c0_i32_1 = arith.constant 0 : i32
    return %c0_i32, %c0_i32_0 : i32, i32
  }
  func.func @transform_2(%arg0: i32) -> (i32, i32) {
    %c0_i32 = arith.constant 0 : i32
    %c0_i32_0 = arith.constant 0 : i32
    %c0_i32_1 = arith.constant 0 : i32
    return %c0_i32, %c0_i32_0 : i32, i32
  }
  func.func @transform_3(%arg0: i32) -> (i32, i32) {
    %c0_i32 = arith.constant 0 : i32
    %c0_i32_0 = arith.constant 0 : i32
    return %arg0, %c0_i32 : i32, i32
  }
  func.func @transform_4(%arg0: i32) -> (i32, i32) {
    %c0_i32 = arith.constant 0 : i32
    %c0_i32_0 = arith.constant 0 : i32
    return %arg0, %c0_i32 : i32, i32
  }
}

module attributes {stable_mosaic.version = 11 : i64} {
  func.func @prop_resident_kernel(%arg0: i32, %arg1: memref<128x256xbf16, #tpu.memory_space<vmem>>, %arg2: memref<256x128xbf16, #tpu.memory_space<vmem>>, %arg3: memref<128x128xf32, #tpu.memory_space<vmem>>, %arg4: memref<128x128xbf16, #tpu.memory_space<vmem>>, %arg5: memref<128x128xbf16, #tpu.memory_space<vmem>>) attributes {dimension_semantics = [#tpu.dimension_semantics<parallel>], iteration_bounds = array<i64: 2>, scalar_prefetch = 0 : i64, scratch_operands = 0 : i64, tpu.core_type = #tpu.core_type<tc>, window_params = [{transform_indices = @transform_0, window_bounds = array<i64: 128, 256>}, {pipeline_mode = #tpu.pipeline_mode<synchronous>, transform_indices = @transform_1, window_bounds = array<i64: 256, 128>}, {transform_indices = @transform_2, window_bounds = array<i64: 128, 128>}, {pipeline_mode = #tpu.pipeline_mode<synchronous>, transform_indices = @transform_3, window_bounds = array<i64: 128, 128>}, {transform_indices = @transform_4, window_bounds = array<i64: 128, 128>}]} {
    %c0 = arith.constant 0 : index
    %c0_0 = arith.constant 0 : index
    %0 = vector.load %arg1[%c0, %c0_0] : memref<128x256xbf16, #tpu.memory_space<vmem>>, vector<128x256xbf16>
    %c0_1 = arith.constant 0 : index
    %c0_2 = arith.constant 0 : index
    %1 = vector.load %arg2[%c0_1, %c0_2] : memref<256x128xbf16, #tpu.memory_space<vmem>>, vector<256x128xbf16>
    %cst = arith.constant dense<0.000000e+00> : vector<128x128xf32>
    %2 = tpu.matmul %0, %1, %cst {dimension_numbers = #tpu.dot_dimension_numbers<[1], [0], [0], [1], [0, 0, 1, 1], [], []>} : vector<128x256xbf16>, vector<256x128xbf16>, vector<128x128xf32> -> vector<128x128xf32>
    %cst_3 = arith.constant 5.000000e-01 : f32
    %3 = vector.broadcast %cst_3 : f32 to vector<128x128xf32>
    %4 = arith.mulf %3, %2 : vector<128x128xf32>
    %c0_4 = arith.constant 0 : index
    %c0_5 = arith.constant 0 : index
    %5 = vector.load %arg3[%c0_4, %c0_5] : memref<128x128xf32, #tpu.memory_space<vmem>>, vector<128x128xf32>
    %6 = arith.addf %4, %5 : vector<128x128xf32>
    %7 = arith.truncf %6 : vector<128x128xf32> to vector<128x128xbf16>
    %c0_6 = arith.constant 0 : index
    %c0_7 = arith.constant 0 : index
    %8 = vector.load %arg4[%c0_6, %c0_7] : memref<128x128xbf16, #tpu.memory_space<vmem>>, vector<128x128xbf16>
    %cst_8 = arith.constant dense<0.000000e+00> : vector<128x128xf32>
    %9 = tpu.matmul %7, %8, %cst_8 {dimension_numbers = #tpu.dot_dimension_numbers<[1], [0], [0], [1], [0, 0, 1, 1], [], []>} : vector<128x128xbf16>, vector<128x128xbf16>, vector<128x128xf32> -> vector<128x128xf32>
    %cst_9 = arith.constant 0.000000e+00 : f32
    %10 = vector.broadcast %cst_9 : f32 to vector<128x128xf32>
    %11 = arith.maximumf %9, %10 : vector<128x128xf32>
    %12 = arith.truncf %11 : vector<128x128xf32> to vector<128x128xbf16>
    %c0_10 = arith.constant 0 : index
    %c0_11 = arith.constant 0 : index
    %13 = vector.load %arg5[%c0_10, %c0_11] : memref<128x128xbf16, #tpu.memory_space<vmem>>, vector<128x128xbf16>
    tpu.vector_store %arg5[%c0_10, %c0_11], %12 {strides = array<i32>} : memref<128x128xbf16, #tpu.memory_space<vmem>>, vector<128x128xbf16>,
    return
  }
  func.func @transform_0(%arg0: i32) -> (i32, i32) {
    %c0_i32 = arith.constant 0 : i32
    %c0_i32_0 = arith.constant 0 : i32
    return %arg0, %c0_i32 : i32, i32
  }
  func.func @transform_1(%arg0: i32) -> (i32, i32) {
    %c0_i32 = arith.constant 0 : i32
    %c0_i32_0 = arith.constant 0 : i32
    %c0_i32_1 = arith.constant 0 : i32
    return %c0_i32, %c0_i32_0 : i32, i32
  }
  func.func @transform_2(%arg0: i32) -> (i32, i32) {
    %c0_i32 = arith.constant 0 : i32
    %c0_i32_0 = arith.constant 0 : i32
    return %arg0, %c0_i32 : i32, i32
  }
  func.func @transform_3(%arg0: i32) -> (i32, i32) {
    %c0_i32 = arith.constant 0 : i32
    %c0_i32_0 = arith.constant 0 : i32
    %c0_i32_1 = arith.constant 0 : i32
    return %c0_i32, %c0_i32_0 : i32, i32
  }
  func.func @transform_4(%arg0: i32) -> (i32, i32) {
    %c0_i32 = arith.constant 0 : i32
    %c0_i32_0 = arith.constant 0 : i32
    return %arg0, %c0_i32 : i32, i32
  }
}

module attributes {stable_mosaic.version = 11 : i64} {
  func.func @head_kernel(%arg0: i32, %arg1: memref<8x256xf32, #tpu.memory_space<vmem>>, %arg2: memref<256x128xbf16, #tpu.memory_space<vmem>>, %arg3: memref<128x128xf32, #tpu.memory_space<vmem>>, %arg4: memref<1x128xf32, #tpu.memory_space<vmem>>, %arg5: memref<128x128xf32, #tpu.memory_space<vmem>>, %arg6: memref<1x128xf32, #tpu.memory_space<vmem>>, %arg7: memref<8x128xf32, #tpu.memory_space<vmem>>, %arg8: memref<8x128xf32, #tpu.memory_space<vmem>>) attributes {dimension_semantics = [#tpu.dimension_semantics<arbitrary>], iteration_bounds = array<i64: 1>, scalar_prefetch = 0 : i64, scratch_operands = 1 : i64, tpu.core_type = #tpu.core_type<tc>, window_params = [{transform_indices = @transform_0, window_bounds = array<i64: 8, 256>}, {transform_indices = @transform_1, window_bounds = array<i64: 256, 128>}, {pipeline_mode = #tpu.pipeline_mode<synchronous>, transform_indices = @transform_2, window_bounds = array<i64: 128, 128>}, {pipeline_mode = #tpu.pipeline_mode<synchronous>, transform_indices = @transform_3, window_bounds = array<i64: 1, 128>}, {pipeline_mode = #tpu.pipeline_mode<synchronous>, transform_indices = @transform_4, window_bounds = array<i64: 128, 128>}, {pipeline_mode = #tpu.pipeline_mode<synchronous>, transform_indices = @transform_5, window_bounds = array<i64: 1, 128>}, {pipeline_mode = #tpu.pipeline_mode<synchronous>, transform_indices = @transform_6, window_bounds = array<i64: 8, 128>}]} {
    %c0_i32 = arith.constant 0 : i32
    %0 = arith.cmpi eq, %arg0, %c0_i32 : i32
    %1 = arith.extui %0 : i1 to i32
    %c0_i32_0 = arith.constant 0 : i32
    %2 = arith.cmpi ne, %1, %c0_i32_0 : i32
    scf.if %2 {
      %cst_10 = arith.constant 0.000000e+00 : f32
      %13 = vector.broadcast %cst_10 : f32 to vector<8x128xf32>
      %c0_11 = arith.constant 0 : index
      %c0_12 = arith.constant 0 : index
      %14 = vector.load %arg8[%c0_11, %c0_12] : memref<8x128xf32, #tpu.memory_space<vmem>>, vector<8x128xf32>
      tpu.vector_store %arg8[%c0_11, %c0_12], %13 {strides = array<i32>} : memref<8x128xf32, #tpu.memory_space<vmem>>, vector<8x128xf32>,
    } else {
    }
    %c0 = arith.constant 0 : index
    %c0_1 = arith.constant 0 : index
    %3 = vector.load %arg8[%c0, %c0_1] : memref<8x128xf32, #tpu.memory_space<vmem>>, vector<8x128xf32>
    %c0_2 = arith.constant 0 : index
    %c0_3 = arith.constant 0 : index
    %4 = vector.load %arg1[%c0_2, %c0_3] : memref<8x256xf32, #tpu.memory_space<vmem>>, vector<8x256xf32>
    %c0_4 = arith.constant 0 : index
    %c0_5 = arith.constant 0 : index
    %5 = vector.load %arg2[%c0_4, %c0_5] : memref<256x128xbf16, #tpu.memory_space<vmem>>, vector<256x128xbf16>
    %6 = arith.extf %5 : vector<256x128xbf16> to vector<256x128xf32>
    %cst = arith.constant dense<0.000000e+00> : vector<8x128xf32>
    %7 = tpu.matmul %4, %6, %cst {dimension_numbers = #tpu.dot_dimension_numbers<[1], [0], [0], [1], [0, 0, 1, 1], [], []>} : vector<8x256xf32>, vector<256x128xf32>, vector<8x128xf32> -> vector<8x128xf32>
    %8 = arith.addf %3, %7 : vector<8x128xf32>
    %c0_6 = arith.constant 0 : index
    %c0_7 = arith.constant 0 : index
    %9 = vector.load %arg8[%c0_6, %c0_7] : memref<8x128xf32, #tpu.memory_space<vmem>>, vector<8x128xf32>
    tpu.vector_store %arg8[%c0_6, %c0_7], %8 {strides = array<i32>} : memref<8x128xf32, #tpu.memory_space<vmem>>, vector<8x128xf32>,
    %c0_i32_8 = arith.constant 0 : i32
    %10 = arith.cmpi eq, %arg0, %c0_i32_8 : i32
    %11 = arith.extui %10 : i1 to i32
    %c0_i32_9 = arith.constant 0 : i32
    %12 = arith.cmpi ne, %11, %c0_i32_9 : i32
    scf.if %12 {
      %c0_10 = arith.constant 0 : index
      %c0_11 = arith.constant 0 : index
      %13 = vector.load %arg8[%c0_10, %c0_11] : memref<8x128xf32, #tpu.memory_space<vmem>>, vector<8x128xf32>
      %c0_12 = arith.constant 0 : index
      %c0_13 = arith.constant 0 : index
      %14 = vector.load %arg3[%c0_12, %c0_13] : memref<128x128xf32, #tpu.memory_space<vmem>>, vector<128x128xf32>
      %cst_14 = arith.constant dense<0.000000e+00> : vector<8x128xf32>
      %15 = tpu.matmul %13, %14, %cst_14 {dimension_numbers = #tpu.dot_dimension_numbers<[1], [0], [0], [1], [0, 0, 1, 1], [], []>} : vector<8x128xf32>, vector<128x128xf32>, vector<8x128xf32> -> vector<8x128xf32>
      %c0_15 = arith.constant 0 : index
      %c0_16 = arith.constant 0 : index
      %16 = vector.load %arg4[%c0_15, %c0_16] : memref<1x128xf32, #tpu.memory_space<vmem>>, vector<1x128xf32>
      %17 = vector.broadcast %16 : vector<1x128xf32> to vector<8x128xf32>
      %18 = arith.addf %15, %17 : vector<8x128xf32>
      %cst_17 = arith.constant 0.000000e+00 : f32
      %19 = vector.broadcast %cst_17 : f32 to vector<8x128xf32>
      %20 = arith.maximumf %18, %19 : vector<8x128xf32>
      %c0_18 = arith.constant 0 : index
      %c0_19 = arith.constant 0 : index
      %21 = vector.load %arg5[%c0_18, %c0_19] : memref<128x128xf32, #tpu.memory_space<vmem>>, vector<128x128xf32>
      %cst_20 = arith.constant dense<0.000000e+00> : vector<8x128xf32>
      %22 = tpu.matmul %20, %21, %cst_20 {dimension_numbers = #tpu.dot_dimension_numbers<[1], [0], [0], [1], [0, 0, 1, 1], [], []>} : vector<8x128xf32>, vector<128x128xf32>, vector<8x128xf32> -> vector<8x128xf32>
      %c0_21 = arith.constant 0 : index
      %c0_22 = arith.constant 0 : index
      %23 = vector.load %arg6[%c0_21, %c0_22] : memref<1x128xf32, #tpu.memory_space<vmem>>, vector<1x128xf32>
      %24 = vector.broadcast %23 : vector<1x128xf32> to vector<8x128xf32>
      %25 = arith.addf %22, %24 : vector<8x128xf32>
      %c0_23 = arith.constant 0 : index
      %c0_24 = arith.constant 0 : index
      %26 = vector.load %arg7[%c0_23, %c0_24] : memref<8x128xf32, #tpu.memory_space<vmem>>, vector<8x128xf32>
      tpu.vector_store %arg7[%c0_23, %c0_24], %25 {strides = array<i32>} : memref<8x128xf32, #tpu.memory_space<vmem>>, vector<8x128xf32>,
    } else {
    }
    return
  }
  func.func @transform_0(%arg0: i32) -> (i32, i32) {
    %c0_i32 = arith.constant 0 : i32
    %c0_i32_0 = arith.constant 0 : i32
    return %c0_i32, %arg0 : i32, i32
  }
  func.func @transform_1(%arg0: i32) -> (i32, i32) {
    %c0_i32 = arith.constant 0 : i32
    %c0_i32_0 = arith.constant 0 : i32
    return %arg0, %c0_i32 : i32, i32
  }
  func.func @transform_2(%arg0: i32) -> (i32, i32) {
    %c0_i32 = arith.constant 0 : i32
    %c0_i32_0 = arith.constant 0 : i32
    %c0_i32_1 = arith.constant 0 : i32
    return %c0_i32, %c0_i32_0 : i32, i32
  }
  func.func @transform_3(%arg0: i32) -> (i32, i32) {
    %c0_i32 = arith.constant 0 : i32
    %c0_i32_0 = arith.constant 0 : i32
    %c0_i32_1 = arith.constant 0 : i32
    return %c0_i32, %c0_i32_0 : i32, i32
  }
  func.func @transform_4(%arg0: i32) -> (i32, i32) {
    %c0_i32 = arith.constant 0 : i32
    %c0_i32_0 = arith.constant 0 : i32
    %c0_i32_1 = arith.constant 0 : i32
    return %c0_i32, %c0_i32_0 : i32, i32
  }
  func.func @transform_5(%arg0: i32) -> (i32, i32) {
    %c0_i32 = arith.constant 0 : i32
    %c0_i32_0 = arith.constant 0 : i32
    %c0_i32_1 = arith.constant 0 : i32
    return %c0_i32, %c0_i32_0 : i32, i32
  }
  func.func @transform_6(%arg0: i32) -> (i32, i32) {
    %c0_i32 = arith.constant 0 : i32
    %c0_i32_0 = arith.constant 0 : i32
    %c0_i32_1 = arith.constant 0 : i32
    return %c0_i32, %c0_i32_0 : i32, i32
  }
}

</mosaic_0001>

<llo_original>
// kernel: gcnii_forward_pallas.5
$region0: #{gcnii_forward_pallas.5}
  #allocation0 [shape = 'u32[]', space=smem, size = 0x4, offset = 0x4, fixed_abs, tag = 'smem constant byte address 0x4 - core index']
  #allocation1 [shape = 'u32[144,128]{1,0:T(1,128)}', space=vmem, size = 0x12000, scoped, tag = 'internal scratch']
  %s0 = inlined_call_operand.vmem [shape: f32[256,128], index: 0, kind: input, shape index: {}]
  %s1 = inlined_call_operand.vmem [shape: f32[128,128], index: 1, kind: input, shape index: {}]
  %s2 = inlined_call_operand.vmem [shape: f32[1,128], index: 2, kind: input, shape index: {}]
  %s3 = inlined_call_operand.vmem [shape: bf16[256,128], index: 3, kind: output, shape index: {0}]
  %s4 = inlined_call_operand.vmem [shape: f32[256,128], index: 4, kind: output, shape index: {1}]
  %5 = xla_tuple %s3, %s4
  %s6 = sld [smem:[#allocation0]]
  $region53: #{gcnii_forward_pallas.5} parent=0
    _
  %s8 = ssub.s32 1, %s6
  %s9 = scalar_select 0, %s8, %s6
  loop: start=0, step=1, limit=4
  $region2: #{gcnii_forward_pallas.5} parent=0 // loop_pre_header
    _
  $region3: #{gcnii_forward_pallas.5} parent=0 // loop_header
    %s11 = sphi 0, %s15
    %p12 = scmp.ge.s32.totalorder %s11, 4
    %s21 = sphi 0, %s23
    %s24 = sphi 0, %s21
    %s25 = sphi 0, %s24
    %s41 = sphi 0, %s25
    %s45 = sphi 0, %s45
    %s47 = sphi 0, %s45
    %s48 = sphi 0, %s47
    %s62 = sphi 0, %s48
    %s66 = sphi 0, %s66
    %s68 = sphi 0, %s66
    %s69 = sphi 0, %s68
    %s83 = sphi 0, %s69
    %s89 = sphi 0, %s91
    %s92 = sphi 0, %s89
    %s93 = sphi 0, %s92
    %s109 = sphi 0, %s93
    %s115 = sphi 0, %s117
    %s118 = sphi 0, %s115
    %s119 = sphi 0, %s118
    %s135 = sphi 0, %s119
  $region4: #{gcnii_forward_pallas.5} parent=0 // loop_header_branch
    %14 = sbr.rel (%p12) target = $region8
  $region5: #{gcnii_forward_pallas.5} parent=0 // loop_body
    %s16 = ssub.s32 %s11, 1
    %s17 = ssub.s32 %s11, 2
    %s18 = sadd.s32 %s11, 1
    %s19 = ssub.s32 %s11, %s18
    %p20 = scmp.eq.s32.totalorder %s19, 0
    %s22 = sadd.s32 %s21, 1
    %s23 = scalar_select %p20, %s21, %s22
    %p26 = pneg %p20
    %p27 = scmp.eq.s32.totalorder %s11, 1
    %p28 = por %p26, %p27
    %p29 = scmp.ne.s32.totalorder %s21, %s24
    %p30 = scmp.eq.s32.totalorder %s11, 0
    %p31 = por %p29, %p30
    %p32 = scmp.ne.s32.totalorder %s21, %s24
    %p33 = scmp.eq.s32.totalorder %s16, 1
    %p34 = por %p32, %p33
    %p35 = scmp.ne.s32.totalorder %s24, %s25
    %p36 = scmp.eq.s32.totalorder %s16, 0
    %p37 = por %p35, %p36
    %p38 = scmp.ne.s32.totalorder %s24, %s25
    %p39 = scmp.eq.s32.totalorder %s17, 1
    %p40 = por %p38, %p39
    %p42 = scmp.ne.s32.totalorder %s25, %s41
    %p43 = scmp.eq.s32.totalorder %s17, 0
    %p44 = por %p42, %p43
    %s46 = sadd.s32 %s45, 1
    %p49 = scmp.eq.s32.totalorder %s11, 1
    %p50 = scmp.ne.s32.totalorder %s45, %s47
    %p51 = scmp.eq.s32.totalorder %s11, 0
    %p52 = por %p50, %p51
    %p53 = scmp.ne.s32.totalorder %s45, %s47
    %p54 = scmp.eq.s32.totalorder %s16, 1
    %p55 = por %p53, %p54
    %p56 = scmp.ne.s32.totalorder %s47, %s48
    %p57 = scmp.eq.s32.totalorder %s16, 0
    %p58 = por %p56, %p57
    %p59 = scmp.ne.s32.totalorder %s47, %s48
    %p60 = scmp.eq.s32.totalorder %s17, 1
    %p61 = por %p59, %p60
    %p63 = scmp.ne.s32.totalorder %s48, %s62
    %p64 = scmp.eq.s32.totalorder %s17, 0
    %p65 = por %p63, %p64
    %s67 = sadd.s32 %s66, 1
    %p70 = scmp.eq.s32.totalorder %s11, 1
    %p71 = scmp.ne.s32.totalorder %s66, %s68
    %p72 = scmp.eq.s32.totalorder %s11, 0
    %p73 = por %p71, %p72
    %p74 = scmp.ne.s32.totalorder %s66, %s68
    %p75 = scmp.eq.s32.totalorder %s16, 1
    %p76 = por %p74, %p75
    %p77 = scmp.ne.s32.totalorder %s68, %s69
    %p78 = scmp.eq.s32.totalorder %s16, 0
    %p79 = por %p77, %p78
    %p80 = scmp.ne.s32.totalorder %s68, %s69
    %p81 = scmp.eq.s32.totalorder %s17, 1
    %p82 = por %p80, %p81
    %p84 = scmp.ne.s32.totalorder %s69, %s83
    %p85 = scmp.eq.s32.totalorder %s17, 0
    %p86 = por %p84, %p85
    %s87 = ssub.s32 %s11, %s18
    %p88 = scmp.eq.s32.totalorder %s87, 0
    %s90 = sadd.s32 %s89, 1
    %s91 = scalar_select %p88, %s89, %s90
    %p94 = pneg %p88
    %p95 = scmp.eq.s32.totalorder %s11, 1
    %p96 = por %p94, %p95
    %p97 = scmp.ne.s32.totalorder %s89, %s92
    %p98 = scmp.eq.s32.totalorder %s11, 0
    %p99 = por %p97, %p98
    %p100 = scmp.ne.s32.totalorder %s89, %s92
    %p101 = scmp.eq.s32.totalorder %s16, 1
    %p102 = por %p100, %p101
    %p103 = scmp.ne.s32.totalorder %s92, %s93
    %p104 = scmp.eq.s32.totalorder %s16, 0
    %p105 = por %p103, %p104
    %p106 = scmp.ne.s32.totalorder %s92, %s93
    %p107 = scmp.eq.s32.totalorder %s17, 1
    %p108 = por %p106, %p107
    %p110 = scmp.ne.s32.totalorder %s93, %s109
    %p111 = scmp.eq.s32.totalorder %s17, 0
    %p112 = por %p110, %p111
    %s113 = ssub.s32 %s11, %s18
    %p114 = scmp.eq.s32.totalorder %s113, 0
    %s116 = sadd.s32 %s115, 1
    %s117 = scalar_select %p114, %s115, %s116
    %p120 = pneg %p114
    %p121 = scmp.eq.s32.totalorder %s11, 1
    %p122 = por %p120, %p121
    %p123 = scmp.ne.s32.totalorder %s115, %s118
    %p124 = scmp.eq.s32.totalorder %s11, 0
    %p125 = por %p123, %p124
    %p126 = scmp.ne.s32.totalorder %s115, %s118
    %p127 = scmp.eq.s32.totalorder %s16, 1
    %p128 = por %p126, %p127
    %p129 = scmp.ne.s32.totalorder %s118, %s119
    %p130 = scmp.eq.s32.totalorder %s16, 0
    %p131 = por %p129, %p130
    %p132 = scmp.ne.s32.totalorder %s118, %s119
    %p133 = scmp.eq.s32.totalorder %s17, 1
    %p134 = por %p132, %p133
    %p136 = scmp.ne.s32.totalorder %s119, %s135
    %p137 = scmp.eq.s32.totalorder %s17, 0
    %p138 = por %p136, %p137
    %p139 = scmp.le.s32.totalorder 1, %s11
    %p140 = scmp.lt.s32.totalorder %s11, 3
    %p141 = pnand %p139, %p140
    %p142 = pneg %p141
    // Predicated region
    $region9: #{gcnii_forward_pallas.5} parent=5 // pred_check
      _
    $region10: #{gcnii_forward_pallas.5} parent=5 // pred_check_branch
      %144 = sbr.rel (%p141) target = $region12
    $region11: #{gcnii_forward_pallas.5} parent=5 // pred_region
      %s145 = ssub.s32 %s11, 1
      // Predicated region
      $region13: #{gcnii_forward_pallas.5} parent=11 // pred_check
        %p146 = pneg %p58
      $region14: #{gcnii_forward_pallas.5} parent=11 // pred_check_branch
        %148 = sbr.rel (%p146) target = $region16
      $region15: #{gcnii_forward_pallas.5} parent=11 // pred_region
        _
      $region16: #{gcnii_forward_pallas.5} parent=11 // pred_fallthru
        _
      // Predicated region
      $region17: #{gcnii_forward_pallas.5} parent=11 // pred_check
        %p149 = pneg %p79
      $region18: #{gcnii_forward_pallas.5} parent=11 // pred_check_branch
        %151 = sbr.rel (%p149) target = $region20
      $region19: #{gcnii_forward_pallas.5} parent=11 // pred_region
        _
      $region20: #{gcnii_forward_pallas.5} parent=11 // pred_fallthru
        _
    $region12: #{gcnii_forward_pallas.5} parent=5 // pred_fallthru
      _
    %p152 = scmp.lt.s32.totalorder %s11, 2
    // Predicated region
    $region21: #{gcnii_forward_pallas.5} parent=5 // pred_check
      %p153 = pneg %p152
    $region22: #{gcnii_forward_pallas.5} parent=5 // pred_check_branch
      %155 = sbr.rel (%p153) target = $region24
    $region23: #{gcnii_forward_pallas.5} parent=5 // pred_region
      // Predicated region
      $region25: #{gcnii_forward_pallas.5} parent=23 // pred_check
        %p156 = pneg %p31
      $region26: #{gcnii_forward_pallas.5} parent=23 // pred_check_branch
        %158 = sbr.rel (%p156) target = $region28
      $region27: #{gcnii_forward_pallas.5} parent=23 // pred_region
        %s159 = smul.u32 16, %s11
        %p160 = scmp.lt.s32.totalorder %s159, 31
        %s161 = scalar_select %p160, %s159, 31
        %s162 = smul.addr %s161, 8
        %s163 = scalar_lea.vmem %s0, %s162
        %s164 = smul.u32 16, %s11
      $region28: #{gcnii_forward_pallas.5} parent=23 // pred_fallthru
        _
    $region24: #{gcnii_forward_pallas.5} parent=5 // pred_fallthru
      _
    %p165 = scmp.le.s32.totalorder 1, %s11
    %p166 = scmp.lt.s32.totalorder %s11, 3
    %p167 = pnand %p165, %p166
    %p168 = pneg %p167
    // Predicated region
    $region29: #{gcnii_forward_pallas.5} parent=5 // pred_check
      _
    $region30: #{gcnii_forward_pallas.5} parent=5 // pred_check_branch
      %170 = sbr.rel (%p167) target = $region32
    $region31: #{gcnii_forward_pallas.5} parent=5 // pred_region
      %s171 = ssub.s32 %s11, 1
      %s172 = smul.u32 16, %s16
      %p173 = scmp.lt.s32.totalorder %s172, 31
      %s174 = scalar_select %p173, %s172, 31
      %s175 = smul.addr %s174, 8
      %s176 = scalar_lea.vmem %s0, %s175
      %p177 = pneg %p37
      %p178 = pneg %p34
      %p179 = pneg %p58
      %p180 = pneg %p55
      %p181 = pneg %p79
      %p182 = pneg %p76
      %p183 = pneg %p105
      %p184 = pneg %p102
      %s185 = smul.u32 16, %s16
      %p186 = scmp.lt.s32.totalorder %s185, 31
      %s187 = scalar_select %p186, %s185, 31
      %s188 = smul.addr %s187, 4
      %s189 = scalar_lea.vmem %s3, %s188
      %p190 = pneg %p131
      %p191 = pneg %p128
      %s192 = smul.u32 16, %s16
      %p193 = scmp.lt.s32.totalorder %s192, 31
      %s194 = scalar_select %p193, %s192, 31
      %s195 = smul.addr %s194, 8
      %s196 = scalar_lea.vmem %s4, %s195
      %s197 = smul.u32 16, %s16
      %p198 = scmp.lt.s32.totalorder %s197, 31
      %s199 = scalar_select %p198, %s197, 31
      %s200 = smul.addr %s199, 8
      %s201 = scalar_lea.vmem %s0, %s200
      %s202 = smul.u32 16, %s16
      %s203 = smul.u32 16, %s16
      %p204 = scmp.lt.s32.totalorder %s203, 31
      %s205 = scalar_select %p204, %s203, 31
      %s206 = smul.addr %s205, 4
      %s207 = scalar_lea.vmem %s3, %s206
      %s208 = smul.u32 16, %s16
      %s209 = smul.u32 16, %s16
      %p210 = scmp.lt.s32.totalorder %s209, 31
      %s211 = scalar_select %p210, %s209, 31
      %s212 = smul.addr %s211, 8
      %s213 = scalar_lea.vmem %s4, %s212
      %s214 = smul.u32 16, %s16
      %v215 = vld [vmem:[%s201] sm:$0xff]
      %v216 = vld [vmem:[%s201 + $0x8] sm:$0xff]
      %v217 = vld [vmem:[%s201 + $0x10] sm:$0xff]
      %v218 = vld [vmem:[%s201 + $0x18] sm:$0xff]
      %v219 = vld [vmem:[%s201 + $0x20] sm:$0xff]
      %v220 = vld [vmem:[%s201 + $0x28] sm:$0xff]
      %v221 = vld [vmem:[%s201 + $0x30] sm:$0xff]
      %v222 = vld [vmem:[%s201 + $0x38] sm:$0xff]
      %v223 = vld [vmem:[%s201 + $0x40] sm:$0xff]
      %v224 = vld [vmem:[%s201 + $0x48] sm:$0xff]
      %v225 = vld [vmem:[%s201 + $0x50] sm:$0xff]
      %v226 = vld [vmem:[%s201 + $0x58] sm:$0xff]
      %v227 = vld [vmem:[%s201 + $0x60] sm:$0xff]
      %v228 = vld [vmem:[%s201 + $0x68] sm:$0xff]
      %v229 = vld [vmem:[%s201 + $0x70] sm:$0xff]
      %v230 = vld [vmem:[%s201 + $0x78] sm:$0xff]
      %v231 = vld [vmem:[%s1] sm:$0xff]
      %v232 = vld [vmem:[%s1 + $0x8] sm:$0xff]
      %v233 = vld [vmem:[%s1 + $0x10] sm:$0xff]
      %v234 = vld [vmem:[%s1 + $0x18] sm:$0xff]
      %v235 = vld [vmem:[%s1 + $0x20] sm:$0xff]
      %v236 = vld [vmem:[%s1 + $0x28] sm:$0xff]
      %v237 = vld [vmem:[%s1 + $0x30] sm:$0xff]
      %v238 = vld [vmem:[%s1 + $0x38] sm:$0xff]
      %v239 = vld [vmem:[%s1 + $0x40] sm:$0xff]
      %v240 = vld [vmem:[%s1 + $0x48] sm:$0xff]
      %v241 = vld [vmem:[%s1 + $0x50] sm:$0xff]
      %v242 = vld [vmem:[%s1 + $0x58] sm:$0xff]
      %v243 = vld [vmem:[%s1 + $0x60] sm:$0xff]
      %v244 = vld [vmem:[%s1 + $0x68] sm:$0xff]
      %v245 = vld [vmem:[%s1 + $0x70] sm:$0xff]
      %v246 = vld [vmem:[%s1 + $0x78] sm:$0xff]
      %v247 = vld [vmem:[%s2] sm:$0x1]
      %v249 = vlaneseq
      %v250 = vshrl.u32 %v249, 7
      %v251 = vsub.s32 0, %v250
      %v252 = vrot.slane %v247, %v251
      %254 = vmatprep.subr.mxu0 0.0
      %255 = vmatpush1.msra.mxu0 %v231
      %256 = vmatprep.subr.mxu0 0.0
      %257 = vmatpush1.msra.mxu0 %v232
      %258 = vmatprep.subr.mxu0 0.0
      %259 = vmatpush1.msra.mxu0 %v233
      %260 = vmatprep.subr.mxu0 0.0
      %261 = vmatpush1.msra.mxu0 %v234
      %262 = vmatprep.subr.mxu0 0.0
      %263 = vmatpush1.msra.mxu0 %v235
      %264 = vmatprep.subr.mxu0 0.0
      %265 = vmatpush1.msra.mxu0 %v236
      %266 = vmatprep.subr.mxu0 0.0
      %267 = vmatpush1.msra.mxu0 %v237
      %268 = vmatprep.subr.mxu0 0.0
      %269 = vmatpush1.msra.mxu0 %v238
      %270 = vmatprep.subr.mxu0 0.0
      %271 = vmatpush1.msra.mxu0 %v239
      %272 = vmatprep.subr.mxu0 0.0
      %273 = vmatpush1.msra.mxu0 %v240
      %274 = vmatprep.subr.mxu0 0.0
      %275 = vmatpush1.msra.mxu0 %v241
      %276 = vmatprep.subr.mxu0 0.0
      %277 = vmatpush1.msra.mxu0 %v242
      %278 = vmatprep.subr.mxu0 0.0
      %279 = vmatpush1.msra.mxu0 %v243
      %280 = vmatprep.subr.mxu0 0.0
      %281 = vmatpush1.msra.mxu0 %v244
      %282 = vmatprep.subr.mxu0 0.0
      %283 = vmatpush1.msra.mxu0 %v245
      %284 = vmatprep.subr.mxu0 0.0
      %285 = vmatpush1.msra.mxu0 %v246
      %286 = vmatprep.subr.mxu0 0.0
      %287 = vmatpush1.msra.mxu0 0.0
      %288 = vmatprep.subr.mxu0 0.0
      %289 = vmatpush1.msra.mxu0 0.0
      %290 = vmatprep.subr.mxu0 0.0
      %291 = vmatpush1.msra.mxu0 0.0
      %292 = vmatprep.subr.mxu0 0.0
      %293 = vmatpush1.msra.mxu0 0.0
      %294 = vmatprep.subr.mxu0 0.0
      %295 = vmatpush1.msra.mxu0 0.0
      %296 = vmatprep.subr.mxu0 0.0
      %297 = vmatpush1.msra.mxu0 0.0
      %298 = vmatprep.subr.mxu0 0.0
      %299 = vmatpush1.msra.mxu0 0.0
      %300 = vmatprep.subr.mxu0 0.0
      %301 = vmatpush1.msra.mxu0 0.0
      %302 = vmatprep.subr.mxu0 0.0
      %303 = vmatpush1.msra.mxu0 0.0
      %304 = vmatprep.subr.mxu0 0.0
      %305 = vmatpush1.msra.mxu0 0.0
      %306 = vmatprep.subr.mxu0 0.0
      %307 = vmatpush1.msra.mxu0 0.0
      %308 = vmatprep.subr.mxu0 0.0
      %309 = vmatpush1.msra.mxu0 0.0
      %310 = vmatprep.subr.mxu0 0.0
      %311 = vmatpush1.msra.mxu0 0.0
      %312 = vmatprep.subr.mxu0 0.0
      %313 = vmatpush1.msra.mxu0 0.0
      %314 = vmatprep.subr.mxu0 0.0
      %315 = vmatpush1.msra.mxu0 0.0
      %316 = vmatprep.subr.mxu0 0.0
      %317 = vmatpush1.msra.mxu0 0.0
      %318 = vmatprep.mubr.f32.mxu0 0.0
      %319 = vmatmul.mubr.f32.gmra.mrb[0].mxu0 %v215
      %v320 = vpop.f32.mrb[0].mxu0
      %v321 = vadd.f32 %v252, %v320
      %v322 = vpop.f32.mrb[0].mxu0
      %323 = vmatprep.mubr.f32.mxu0 0.0
      %324 = vmatmul.mubr.f32.gmra.mrb[0].mxu0 %v216
      %v325 = vpop.f32.mrb[0].mxu0
      %v326 = vadd.f32 %v252, %v325
      %v327 = vpop.f32.mrb[0].mxu0
      %328 = vmatprep.mubr.f32.mxu0 0.0
      %329 = vmatmul.mubr.f32.gmra.mrb[0].mxu0 %v217
      %v330 = vpop.f32.mrb[0].mxu0
      %v331 = vadd.f32 %v252, %v330
      %v332 = vpop.f32.mrb[0].mxu0
      %333 = vmatprep.mubr.f32.mxu0 0.0
      %334 = vmatmul.mubr.f32.gmra.mrb[0].mxu0 %v218
      %v335 = vpop.f32.mrb[0].mxu0
      %v336 = vadd.f32 %v252, %v335
      %v337 = vpop.f32.mrb[0].mxu0
      %338 = vmatprep.mubr.f32.mxu0 0.0
      %339 = vmatmul.mubr.f32.gmra.mrb[0].mxu0 %v219
      %v340 = vpop.f32.mrb[0].mxu0
      %v341 = vadd.f32 %v252, %v340
      %v342 = vpop.f32.mrb[0].mxu0
      %343 = vmatprep.mubr.f32.mxu0 0.0
      %344 = vmatmul.mubr.f32.gmra.mrb[0].mxu0 %v220
      %v345 = vpop.f32.mrb[0].mxu0
      %v346 = vadd.f32 %v252, %v345
      %v347 = vpop.f32.mrb[0].mxu0
      %348 = vmatprep.mubr.f32.mxu0 0.0
      %349 = vmatmul.mubr.f32.gmra.mrb[0].mxu0 %v221
      %v350 = vpop.f32.mrb[0].mxu0
      %v351 = vadd.f32 %v252, %v350
      %v352 = vpop.f32.mrb[0].mxu0
      %353 = vmatprep.mubr.f32.mxu0 0.0
      %354 = vmatmul.mubr.f32.gmra.mrb[0].mxu0 %v222
      %v355 = vpop.f32.mrb[0].mxu0
      %v356 = vadd.f32 %v252, %v355
      %v357 = vpop.f32.mrb[0].mxu0
      %358 = vmatprep.mubr.f32.mxu0 0.0
      %359 = vmatmul.mubr.f32.gmra.mrb[0].mxu0 %v223
      %v360 = vpop.f32.mrb[0].mxu0
      %v361 = vadd.f32 %v252, %v360
      %v362 = vpop.f32.mrb[0].mxu0
      %363 = vmatprep.mubr.f32.mxu0 0.0
      %364 = vmatmul.mubr.f32.gmra.mrb[0].mxu0 %v224
      %v365 = vpop.f32.mrb[0].mxu0
      %v366 = vadd.f32 %v252, %v365
      %v367 = vpop.f32.mrb[0].mxu0
      %368 = vmatprep.mubr.f32.mxu0 0.0
      %369 = vmatmul.mubr.f32.gmra.mrb[0].mxu0 %v225
      %v370 = vpop.f32.mrb[0].mxu0
      %v371 = vadd.f32 %v252, %v370
      %v372 = vpop.f32.mrb[0].mxu0
      %373 = vmatprep.mubr.f32.mxu0 0.0
      %374 = vmatmul.mubr.f32.gmra.mrb[0].mxu0 %v226
      %v375 = vpop.f32.mrb[0].mxu0
      %v376 = vadd.f32 %v252, %v375
      %v377 = vpop.f32.mrb[0].mxu0
      %378 = vmatprep.mubr.f32.mxu0 0.0
      %379 = vmatmul.mubr.f32.gmra.mrb[0].mxu0 %v227
      %v380 = vpop.f32.mrb[0].mxu0
      %v381 = vadd.f32 %v252, %v380
      %v382 = vpop.f32.mrb[0].mxu0
      %383 = vmatprep.mubr.f32.mxu0 0.0
      %384 = vmatmul.mubr.f32.gmra.mrb[0].mxu0 %v228
      %v385 = vpop.f32.mrb[0].mxu0
      %v386 = vadd.f32 %v252, %v385
      %v387 = vpop.f32.mrb[0].mxu0
      %388 = vmatprep.mubr.f32.mxu0 0.0
      %389 = vmatmul.mubr.f32.gmra.mrb[0].mxu0 %v229
      %v390 = vpop.f32.mrb[0].mxu0
      %v391 = vadd.f32 %v252, %v390
      %v392 = vpop.f32.mrb[0].mxu0
      %393 = vmatprep.mubr.f32.mxu0 0.0
      %394 = vmatmul.mubr.f32.gmra.mrb[0].mxu0 %v230
      %v395 = vpop.f32.mrb[0].mxu0
      %v396 = vadd.f32 %v252, %v395
      %v397 = vpop.f32.mrb[0].mxu0
      %398 = vdwg.mxu0
      %v399 = vmax.f32 %v321, 0.0
      %v400 = vmax.f32 %v326, 0.0
      %v401 = vmax.f32 %v331, 0.0
      %v402 = vmax.f32 %v336, 0.0
      %v403 = vmax.f32 %v341, 0.0
      %v404 = vmax.f32 %v346, 0.0
      %v405 = vmax.f32 %v351, 0.0
      %v406 = vmax.f32 %v356, 0.0
      %v407 = vmax.f32 %v361, 0.0
      %v408 = vmax.f32 %v366, 0.0
      %v409 = vmax.f32 %v371, 0.0
      %v410 = vmax.f32 %v376, 0.0
      %v411 = vmax.f32 %v381, 0.0
      %v412 = vmax.f32 %v386, 0.0
      %v413 = vmax.f32 %v391, 0.0
      %v414 = vmax.f32 %v396, 0.0
      %v415 = vpack.c.bf16 %v400, %v399
      %v416 = vpack.c.bf16 %v402, %v401
      %v417 = vpack.c.bf16 %v404, %v403
      %v418 = vpack.c.bf16 %v406, %v405
      %v419 = vpack.c.bf16 %v408, %v407
      %v420 = vpack.c.bf16 %v410, %v409
      %v421 = vpack.c.bf16 %v412, %v411
      %v422 = vpack.c.bf16 %v414, %v413
      %v431 = vunpack.c.l.b16 %v415
      %v432 = vunpack.c.h.b16 %v415
      %v433 = vunpack.c.l.b16 %v416
      %v434 = vunpack.c.h.b16 %v416
      %v435 = vunpack.c.l.b16 %v417
      %v436 = vunpack.c.h.b16 %v417
      %v437 = vunpack.c.l.b16 %v418
      %v438 = vunpack.c.h.b16 %v418
      %v439 = vunpack.c.l.b16 %v419
      %v440 = vunpack.c.h.b16 %v419
      %v441 = vunpack.c.l.b16 %v420
      %v442 = vunpack.c.h.b16 %v420
      %v443 = vunpack.c.l.b16 %v421
      %v444 = vunpack.c.h.b16 %v421
      %v445 = vunpack.c.l.b16 %v422
      %v446 = vunpack.c.h.b16 %v422
      %v447 = vpack.c.b16 %v431, %v431
      %v448 = vpack.c.b16 %v432, %v432
      %v449 = vpack.c.b16 %v433, %v433
      %v450 = vpack.c.b16 %v434, %v434
      %v451 = vpack.c.b16 %v435, %v435
      %v452 = vpack.c.b16 %v436, %v436
      %v453 = vpack.c.b16 %v437, %v437
      %v454 = vpack.c.b16 %v438, %v438
      %v455 = vpack.c.b16 %v439, %v439
      %v456 = vpack.c.b16 %v440, %v440
      %v457 = vpack.c.b16 %v441, %v441
      %v458 = vpack.c.b16 %v442, %v442
      %v459 = vpack.c.b16 %v443, %v443
      %v460 = vpack.c.b16 %v444, %v444
      %v461 = vpack.c.b16 %v445, %v445
      %v462 = vpack.c.b16 %v446, %v446
      %479 = vst [vmem:[%s207] sm:$0xf] %v447
      %480 = vst [vmem:[%s207 + $0x4] sm:$0xf] %v448
      %481 = vst [vmem:[%s207 + $0x8] sm:$0xf] %v449
      %482 = vst [vmem:[%s207 + $0xc] sm:$0xf] %v450
      %483 = vst [vmem:[%s207 + $0x10] sm:$0xf] %v451
      %484 = vst [vmem:[%s207 + $0x14] sm:$0xf] %v452
      %485 = vst [vmem:[%s207 + $0x18] sm:$0xf] %v453
      %486 = vst [vmem:[%s207 + $0x1c] sm:$0xf] %v454
      %487 = vst [vmem:[%s207 + $0x20] sm:$0xf] %v455
      %488 = vst [vmem:[%s207 + $0x24] sm:$0xf] %v456
      %489 = vst [vmem:[%s207 + $0x28] sm:$0xf] %v457
      %490 = vst [vmem:[%s207 + $0x2c] sm:$0xf] %v458
      %491 = vst [vmem:[%s207 + $0x30] sm:$0xf] %v459
      %492 = vst [vmem:[%s207 + $0x34] sm:$0xf] %v460
      %493 = vst [vmem:[%s207 + $0x38] sm:$0xf] %v461
      %494 = vst [vmem:[%s207 + $0x3c] sm:$0xf] %v462
      %v495 = vmul.f32 %v399, 0.5
      %v496 = vmul.f32 %v400, 0.5
      %v497 = vmul.f32 %v401, 0.5
      %v498 = vmul.f32 %v402, 0.5
      %v499 = vmul.f32 %v403, 0.5
      %v500 = vmul.f32 %v404, 0.5
      %v501 = vmul.f32 %v405, 0.5
      %v502 = vmul.f32 %v406, 0.5
      %v503 = vmul.f32 %v407, 0.5
      %v504 = vmul.f32 %v408, 0.5
      %v505 = vmul.f32 %v409, 0.5
      %v506 = vmul.f32 %v410, 0.5
      %v507 = vmul.f32 %v411, 0.5
      %v508 = vmul.f32 %v412, 0.5
      %v509 = vmul.f32 %v413, 0.5
      %v510 = vmul.f32 %v414, 0.5
      %511 = vst [vmem:[%s213] sm:$0xff] %v495
      %512 = vst [vmem:[%s213 + $0x8] sm:$0xff] %v496
      %513 = vst [vmem:[%s213 + $0x10] sm:$0xff] %v497
      %514 = vst [vmem:[%s213 + $0x18] sm:$0xff] %v498
      %515 = vst [vmem:[%s213 + $0x20] sm:$0xff] %v499
      %516 = vst [vmem:[%s213 + $0x28] sm:$0xff] %v500
      %517 = vst [vmem:[%s213 + $0x30] sm:$0xff] %v501
      %518 = vst [vmem:[%s213 + $0x38] sm:$0xff] %v502
      %519 = vst [vmem:[%s213 + $0x40] sm:$0xff] %v503
      %520 = vst [vmem:[%s213 + $0x48] sm:$0xff] %v504
      %521 = vst [vmem:[%s213 + $0x50] sm:$0xff] %v505
      %522 = vst [vmem:[%s213 + $0x58] sm:$0xff] %v506
      %523 = vst [vmem:[%s213 + $0x60] sm:$0xff] %v507
      %524 = vst [vmem:[%s213 + $0x68] sm:$0xff] %v508
      %525 = vst [vmem:[%s213 + $0x70] sm:$0xff] %v509
      %526 = vst [vmem:[%s213 + $0x78] sm:$0xff] %v510
      %s527 = smul.u32 16, %s16
      %p528 = scmp.lt.s32.totalorder %s527, 31
      %s529 = scalar_select %p528, %s527, 31
      %s530 = smul.addr %s529, 4
      %s531 = scalar_lea.vmem %s3, %s530
      %s532 = smul.u32 16, %s16
      %p533 = scmp.lt.s32.totalorder %s532, 31
      %s534 = scalar_select %p533, %s532, 31
      %s535 = smul.addr %s534, 8
      %s536 = scalar_lea.vmem %s4, %s535
      // Predicated region
      $region33: #{gcnii_forward_pallas.5} parent=31 // pred_check
        %p537 = pneg %p102
      $region34: #{gcnii_forward_pallas.5} parent=31 // pred_check_branch
        %539 = sbr.rel (%p537) target = $region36
      $region35: #{gcnii_forward_pallas.5} parent=31 // pred_region
        %s540 = smul.u32 16, %s16
      $region36: #{gcnii_forward_pallas.5} parent=31 // pred_fallthru
        _
      // Predicated region
      $region37: #{gcnii_forward_pallas.5} parent=31 // pred_check
        %p541 = pneg %p128
      $region38: #{gcnii_forward_pallas.5} parent=31 // pred_check_branch
        %543 = sbr.rel (%p541) target = $region40
      $region39: #{gcnii_forward_pallas.5} parent=31 // pred_region
        %s544 = smul.u32 16, %s16
      $region40: #{gcnii_forward_pallas.5} parent=31 // pred_fallthru
        _
    $region32: #{gcnii_forward_pallas.5} parent=5 // pred_fallthru
      _
    %p545 = scmp.le.s32.totalorder 2, %s11
    // Predicated region
    $region41: #{gcnii_forward_pallas.5} parent=5 // pred_check
      %p546 = pneg %p545
    $region42: #{gcnii_forward_pallas.5} parent=5 // pred_check_branch
      %548 = sbr.rel (%p546) target = $region44
    $region43: #{gcnii_forward_pallas.5} parent=5 // pred_region
      %s549 = ssub.s32 %s11, 2
      // Predicated region
      $region45: #{gcnii_forward_pallas.5} parent=43 // pred_check
        %p550 = pneg %p108
      $region46: #{gcnii_forward_pallas.5} parent=43 // pred_check_branch
        %552 = sbr.rel (%p550) target = $region48
      $region47: #{gcnii_forward_pallas.5} parent=43 // pred_region
        %s553 = smul.u32 16, %s17
        %p554 = scmp.lt.s32.totalorder %s553, 31
        %s555 = scalar_select %p554, %s553, 31
        %s556 = smul.addr %s555, 4
        %s557 = scalar_lea.vmem %s3, %s556
      $region48: #{gcnii_forward_pallas.5} parent=43 // pred_fallthru
        _
      // Predicated region
      $region49: #{gcnii_forward_pallas.5} parent=43 // pred_check
        %p558 = pneg %p134
      $region50: #{gcnii_forward_pallas.5} parent=43 // pred_check_branch
        %560 = sbr.rel (%p558) target = $region52
      $region51: #{gcnii_forward_pallas.5} parent=43 // pred_region
        %s561 = smul.u32 16, %s17
        %p562 = scmp.lt.s32.totalorder %s561, 31
        %s563 = scalar_select %p562, %s561, 31
        %s564 = smul.addr %s563, 8
        %s565 = scalar_lea.vmem %s4, %s564
      $region52: #{gcnii_forward_pallas.5} parent=43 // pred_fallthru
        _
    $region44: #{gcnii_forward_pallas.5} parent=5 // pred_fallthru
      _
  $region6: #{gcnii_forward_pallas.5} parent=0 // loop_footer
    %s15 = sadd.s32 1, %s11
  $region7: #{gcnii_forward_pallas.5} parent=0 // loop_footer_branch
    %10 = sbr.rel target = $region3
  $region8: #{gcnii_forward_pallas.5} parent=0 // loop_exit
    _

// kernel: gcnii_forward_pallas.9
$region0: #{gcnii_forward_pallas.9}
  #allocation0 [shape = 'u32[]', space=smem, size = 0x4, offset = 0x4, fixed_abs, tag = 'smem constant byte address 0x4 - core index']
  #allocation1 [shape = 'u32[144,128]{1,0:T(1,128)}', space=vmem, size = 0x12000, scoped, tag = 'internal scratch']
  #allocation2 [shape = 'f32[8,128]{1,0:T(8,128)}', space=vmem, size = 0x1000, scoped, tag = 'scratch operand']
  %s0 = inlined_call_operand.vmem [shape: f32[8,256], index: 0, kind: input, shape index: {}]
  %s1 = inlined_call_operand.vmem [shape: bf16[256,128], index: 1, kind: input, shape index: {}]
  %s2 = inlined_call_operand.vmem [shape: f32[128,128], index: 2, kind: input, shape index: {}]
  %s3 = inlined_call_operand.vmem [shape: f32[1,128], index: 3, kind: input, shape index: {}]
  %s4 = inlined_call_operand.vmem [shape: f32[128,128], index: 4, kind: input, shape index: {}]
  %s5 = inlined_call_operand.vmem [shape: f32[1,128], index: 5, kind: input, shape index: {}]
  %s6 = inlined_call_operand.vmem [shape: f32[8,128], index: 6, kind: output, shape index: {}]
  %s7 = sld [smem:[#allocation0]]
  $region42: #{gcnii_forward_pallas.9} parent=0
    _
  %s9 = ssub.s32 1, %s7
  %s10 = scalar_select 0, %s9, %s7
  // Predicated region
  $region2: #{gcnii_forward_pallas.9} parent=0 // pred_check
    _
  $region3: #{gcnii_forward_pallas.9} parent=0 // pred_check_branch
    %12 = sbr.rel (0) target = $region5
  $region4: #{gcnii_forward_pallas.9} parent=0 // pred_region
    _
  $region5: #{gcnii_forward_pallas.9} parent=0 // pred_fallthru
    _
  // Predicated region
  $region6: #{gcnii_forward_pallas.9} parent=0 // pred_check
    _
  $region7: #{gcnii_forward_pallas.9} parent=0 // pred_check_branch
    %14 = sbr.rel (0) target = $region9
  $region8: #{gcnii_forward_pallas.9} parent=0 // pred_region
    _
  $region9: #{gcnii_forward_pallas.9} parent=0 // pred_fallthru
    _
  // Predicated region
  $region10: #{gcnii_forward_pallas.9} parent=0 // pred_check
    _
  $region11: #{gcnii_forward_pallas.9} parent=0 // pred_check_branch
    %16 = sbr.rel (0) target = $region13
  $region12: #{gcnii_forward_pallas.9} parent=0 // pred_region
    _
  $region13: #{gcnii_forward_pallas.9} parent=0 // pred_fallthru
    _
  // Predicated region
  $region14: #{gcnii_forward_pallas.9} parent=0 // pred_check
    _
  $region15: #{gcnii_forward_pallas.9} parent=0 // pred_check_branch
    %18 = sbr.rel (0) target = $region17
  $region16: #{gcnii_forward_pallas.9} parent=0 // pred_region
    _
  $region17: #{gcnii_forward_pallas.9} parent=0 // pred_fallthru
    _
  // Predicated region
  $region18: #{gcnii_forward_pallas.9} parent=0 // pred_check
    _
  $region19: #{gcnii_forward_pallas.9} parent=0 // pred_check_branch
    %20 = sbr.rel (0) target = $region21
  $region20: #{gcnii_forward_pallas.9} parent=0 // pred_region
    _
  $region21: #{gcnii_forward_pallas.9} parent=0 // pred_fallthru
    _
  // Predicated region
  $region22: #{gcnii_forward_pallas.9} parent=0 // pred_check
    _
  $region23: #{gcnii_forward_pallas.9} parent=0 // pred_check_branch
    %22 = sbr.rel (0) target = $region25
  $region24: #{gcnii_forward_pallas.9} parent=0 // pred_region
    _
  $region25: #{gcnii_forward_pallas.9} parent=0 // pred_fallthru
    _
  %p23 = scmp.eq.s32.totalorder 0, 0
  // Predicated region
  $region26: #{gcnii_forward_pallas.9} parent=0 // pred_check
    %p24 = pneg %p23
  $region27: #{gcnii_forward_pallas.9} parent=0 // pred_check_branch
    %26 = sbr.rel (%p24) target = $region29
  $region28: #{gcnii_forward_pallas.9} parent=0 // pred_region
    %27 = vst [vmem:[#allocation2] sm:$0xff] 0.0
  $region29: #{gcnii_forward_pallas.9} parent=0 // pred_fallthru
    _
  %v28 = vld [vmem:[#allocation2] sm:$0xff]
  %v29 = vld [vmem:[%s0] sm:$0xff]
  %v30 = vld [vmem:[%s0 + $0x8] sm:$0xff]
  %v31 = vld [vmem:[%s1] sm:$0xf]
  %v32 = vld [vmem:[%s1 + $0x4] sm:$0xf]
  %v33 = vld [vmem:[%s1 + $0x8] sm:$0xf]
  %v34 = vld [vmem:[%s1 + $0xc] sm:$0xf]
  %v35 = vld [vmem:[%s1 + $0x10] sm:$0xf]
  %v36 = vld [vmem:[%s1 + $0x14] sm:$0xf]
  %v37 = vld [vmem:[%s1 + $0x18] sm:$0xf]
  %v38 = vld [vmem:[%s1 + $0x1c] sm:$0xf]
  %v39 = vld [vmem:[%s1 + $0x20] sm:$0xf]
  %v40 = vld [vmem:[%s1 + $0x24] sm:$0xf]
  %v41 = vld [vmem:[%s1 + $0x28] sm:$0xf]
  %v42 = vld [vmem:[%s1 + $0x2c] sm:$0xf]
  %v43 = vld [vmem:[%s1 + $0x30] sm:$0xf]
  %v44 = vld [vmem:[%s1 + $0x34] sm:$0xf]
  %v45 = vld [vmem:[%s1 + $0x38] sm:$0xf]
  %v46 = vld [vmem:[%s1 + $0x3c] sm:$0xf]
  %v47 = vld [vmem:[%s1 + $0x40] sm:$0xf]
  %v48 = vld [vmem:[%s1 + $0x44] sm:$0xf]
  %v49 = vld [vmem:[%s1 + $0x48] sm:$0xf]
  %v50 = vld [vmem:[%s1 + $0x4c] sm:$0xf]
  %v51 = vld [vmem:[%s1 + $0x50] sm:$0xf]
  %v52 = vld [vmem:[%s1 + $0x54] sm:$0xf]
  %v53 = vld [vmem:[%s1 + $0x58] sm:$0xf]
  %v54 = vld [vmem:[%s1 + $0x5c] sm:$0xf]
  %v55 = vld [vmem:[%s1 + $0x60] sm:$0xf]
  %v56 = vld [vmem:[%s1 + $0x64] sm:$0xf]
  %v57 = vld [vmem:[%s1 + $0x68] sm:$0xf]
  %v58 = vld [vmem:[%s1 + $0x6c] sm:$0xf]
  %v59 = vld [vmem:[%s1 + $0x70] sm:$0xf]
  %v60 = vld [vmem:[%s1 + $0x74] sm:$0xf]
  %v61 = vld [vmem:[%s1 + $0x78] sm:$0xf]
  %v62 = vld [vmem:[%s1 + $0x7c] sm:$0xf]
  %v63 = vunpack.c.l.bf16 %v31
  %v64 = vunpack.c.l.bf16 %v32
  %v65 = vunpack.c.l.bf16 %v33
  %v66 = vunpack.c.l.bf16 %v34
  %v67 = vunpack.c.l.bf16 %v35
  %v68 = vunpack.c.l.bf16 %v36
  %v69 = vunpack.c.l.bf16 %v37
  %v70 = vunpack.c.l.bf16 %v38
  %v71 = vunpack.c.l.bf16 %v39
  %v72 = vunpack.c.l.bf16 %v40
  %v73 = vunpack.c.l.bf16 %v41
  %v74 = vunpack.c.l.bf16 %v42
  %v75 = vunpack.c.l.bf16 %v43
  %v76 = vunpack.c.l.bf16 %v44
  %v77 = vunpack.c.l.bf16 %v45
  %v78 = vunpack.c.l.bf16 %v46
  %v79 = vunpack.c.l.bf16 %v47
  %v80 = vunpack.c.l.bf16 %v48
  %v81 = vunpack.c.l.bf16 %v49
  %v82 = vunpack.c.l.bf16 %v50
  %v83 = vunpack.c.l.bf16 %v51
  %v84 = vunpack.c.l.bf16 %v52
  %v85 = vunpack.c.l.bf16 %v53
  %v86 = vunpack.c.l.bf16 %v54
  %v87 = vunpack.c.l.bf16 %v55
  %v88 = vunpack.c.l.bf16 %v56
  %v89 = vunpack.c.l.bf16 %v57
  %v90 = vunpack.c.l.bf16 %v58
  %v91 = vunpack.c.l.bf16 %v59
  %v92 = vunpack.c.l.bf16 %v60
  %v93 = vunpack.c.l.bf16 %v61
  %v94 = vunpack.c.l.bf16 %v62
  %95 = vmatprep.subr.mxu0 0.0
  %96 = vmatpush1.msra.mxu0 %v63
  %97 = vmatprep.subr.mxu0 0.0
  %98 = vmatpush1.msra.mxu0 %v64
  %99 = vmatprep.subr.mxu0 0.0
  %100 = vmatpush1.msra.mxu0 %v65
  %101 = vmatprep.subr.mxu0 0.0
  %102 = vmatpush1.msra.mxu0 %v66
  %103 = vmatprep.subr.mxu0 0.0
  %104 = vmatpush1.msra.mxu0 %v67
  %105 = vmatprep.subr.mxu0 0.0
  %106 = vmatpush1.msra.mxu0 %v68
  %107 = vmatprep.subr.mxu0 0.0
  %108 = vmatpush1.msra.mxu0 %v69
  %109 = vmatprep.subr.mxu0 0.0
  %110 = vmatpush1.msra.mxu0 %v70
  %111 = vmatprep.subr.mxu0 0.0
  %112 = vmatpush1.msra.mxu0 %v71
  %113 = vmatprep.subr.mxu0 0.0
  %114 = vmatpush1.msra.mxu0 %v72
  %115 = vmatprep.subr.mxu0 0.0
  %116 = vmatpush1.msra.mxu0 %v73
  %117 = vmatprep.subr.mxu0 0.0
  %118 = vmatpush1.msra.mxu0 %v74
  %119 = vmatprep.subr.mxu0 0.0
  %120 = vmatpush1.msra.mxu0 %v75
  %121 = vmatprep.subr.mxu0 0.0
  %122 = vmatpush1.msra.mxu0 %v76
  %123 = vmatprep.subr.mxu0 0.0
  %124 = vmatpush1.msra.mxu0 %v77
  %125 = vmatprep.subr.mxu0 0.0
  %126 = vmatpush1.msra.mxu0 %v78
  %127 = vmatprep.subr.mxu0 0.0
  %128 = vmatpush1.msra.mxu0 %v79
  %129 = vmatprep.subr.mxu0 0.0
  %130 = vmatpush1.msra.mxu0 %v80
  %131 = vmatprep.subr.mxu0 0.0
  %132 = vmatpush1.msra.mxu0 %v81
  %133 = vmatprep.subr.mxu0 0.0
  %134 = vmatpush1.msra.mxu0 %v82
  %135 = vmatprep.subr.mxu0 0.0
  %136 = vmatpush1.msra.mxu0 %v83
  %137 = vmatprep.subr.mxu0 0.0
  %138 = vmatpush1.msra.mxu0 %v84
  %139 = vmatprep.subr.mxu0 0.0
  %140 = vmatpush1.msra.mxu0 %v85
  %141 = vmatprep.subr.mxu0 0.0
  %142 = vmatpush1.msra.mxu0 %v86
  %143 = vmatprep.subr.mxu0 0.0
  %144 = vmatpush1.msra.mxu0 %v87
  %145 = vmatprep.subr.mxu0 0.0
  %146 = vmatpush1.msra.mxu0 %v88
  %147 = vmatprep.subr.mxu0 0.0
  %148 = vmatpush1.msra.mxu0 %v89
  %149 = vmatprep.subr.mxu0 0.0
  %150 = vmatpush1.msra.mxu0 %v90
  %151 = vmatprep.subr.mxu0 0.0
  %152 = vmatpush1.msra.mxu0 %v91
  %153 = vmatprep.subr.mxu0 0.0
  %154 = vmatpush1.msra.mxu0 %v92
  %155 = vmatprep.subr.mxu0 0.0
  %156 = vmatpush1.msra.mxu0 %v93
  %157 = vmatprep.subr.mxu0 0.0
  %158 = vmatpush1.msra.mxu0 %v94
  %159 = vmatprep.mubr.f32.mxu0 %v30
  %160 = vmatmul.mubr.f32.gmra.mrb[0].mxu0 %v29
  %v161 = vpop.f32.mrb[0].mxu0
  %v162 = vadd.f32 0.0, %v161
  %v163 = vpop.f32.mrb[0].mxu0
  %164 = vdwg.mxu0
  %v165 = vadd.f32 %v28, %v162
  %166 = vst [vmem:[#allocation2] sm:$0xff] %v165
  // Predicated region
  $region30: #{gcnii_forward_pallas.9} parent=0 // pred_check
    %p167 = pneg %p23
  $region31: #{gcnii_forward_pallas.9} parent=0 // pred_check_branch
    %169 = sbr.rel (%p167) target = $region33
  $region32: #{gcnii_forward_pallas.9} parent=0 // pred_region
    %v170 = vld [vmem:[#allocation2] sm:$0xff]
    %v171 = vld [vmem:[%s2] sm:$0xff]
    %v172 = vld [vmem:[%s2 + $0x8] sm:$0xff]
    %v173 = vld [vmem:[%s2 + $0x10] sm:$0xff]
    %v174 = vld [vmem:[%s2 + $0x18] sm:$0xff]
    %v175 = vld [vmem:[%s2 + $0x20] sm:$0xff]
    %v176 = vld [vmem:[%s2 + $0x28] sm:$0xff]
    %v177 = vld [vmem:[%s2 + $0x30] sm:$0xff]
    %v178 = vld [vmem:[%s2 + $0x38] sm:$0xff]
    %v179 = vld [vmem:[%s2 + $0x40] sm:$0xff]
    %v180 = vld [vmem:[%s2 + $0x48] sm:$0xff]
    %v181 = vld [vmem:[%s2 + $0x50] sm:$0xff]
    %v182 = vld [vmem:[%s2 + $0x58] sm:$0xff]
    %v183 = vld [vmem:[%s2 + $0x60] sm:$0xff]
    %v184 = vld [vmem:[%s2 + $0x68] sm:$0xff]
    %v185 = vld [vmem:[%s2 + $0x70] sm:$0xff]
    %v186 = vld [vmem:[%s2 + $0x78] sm:$0xff]
    %v187 = vld [vmem:[%s3] sm:$0x1]
    %v189 = vlaneseq
    %v190 = vshrl.u32 %v189, 7
    %v191 = vsub.s32 0, %v190
    %v192 = vrot.slane %v187, %v191
    %194 = vmatprep.subr.mxu0 0.0
    %195 = vmatpush1.msra.mxu0 %v171
    %196 = vmatprep.subr.mxu0 0.0
    %197 = vmatpush1.msra.mxu0 %v172
    %198 = vmatprep.subr.mxu0 0.0
    %199 = vmatpush1.msra.mxu0 %v173
    %200 = vmatprep.subr.mxu0 0.0
    %201 = vmatpush1.msra.mxu0 %v174
    %202 = vmatprep.subr.mxu0 0.0
    %203 = vmatpush1.msra.mxu0 %v175
    %204 = vmatprep.subr.mxu0 0.0
    %205 = vmatpush1.msra.mxu0 %v176
    %206 = vmatprep.subr.mxu0 0.0
    %207 = vmatpush1.msra.mxu0 %v177
    %208 = vmatprep.subr.mxu0 0.0
    %209 = vmatpush1.msra.mxu0 %v178
    %210 = vmatprep.subr.mxu0 0.0
    %211 = vmatpush1.msra.mxu0 %v179
    %212 = vmatprep.subr.mxu0 0.0
    %213 = vmatpush1.msra.mxu0 %v180
    %214 = vmatprep.subr.mxu0 0.0
    %215 = vmatpush1.msra.mxu0 %v181
    %216 = vmatprep.subr.mxu0 0.0
    %217 = vmatpush1.msra.mxu0 %v182
    %218 = vmatprep.subr.mxu0 0.0
    %219 = vmatpush1.msra.mxu0 %v183
    %220 = vmatprep.subr.mxu0 0.0
    %221 = vmatpush1.msra.mxu0 %v184
    %222 = vmatprep.subr.mxu0 0.0
    %223 = vmatpush1.msra.mxu0 %v185
    %224 = vmatprep.subr.mxu0 0.0
    %225 = vmatpush1.msra.mxu0 %v186
    %226 = vmatprep.subr.mxu0 0.0
    %227 = vmatpush1.msra.mxu0 0.0
    %228 = vmatprep.subr.mxu0 0.0
    %229 = vmatpush1.msra.mxu0 0.0
    %230 = vmatprep.subr.mxu0 0.0
    %231 = vmatpush1.msra.mxu0 0.0
    %232 = vmatprep.subr.mxu0 0.0
    %233 = vmatpush1.msra.mxu0 0.0
    %234 = vmatprep.subr.mxu0 0.0
    %235 = vmatpush1.msra.mxu0 0.0
    %236 = vmatprep.subr.mxu0 0.0
    %237 = vmatpush1.msra.mxu0 0.0
    %238 = vmatprep.subr.mxu0 0.0
    %239 = vmatpush1.msra.mxu0 0.0
    %240 = vmatprep.subr.mxu0 0.0
    %241 = vmatpush1.msra.mxu0 0.0
    %242 = vmatprep.subr.mxu0 0.0
    %243 = vmatpush1.msra.mxu0 0.0
    %244 = vmatprep.subr.mxu0 0.0
    %245 = vmatpush1.msra.mxu0 0.0
    %246 = vmatprep.subr.mxu0 0.0
    %247 = vmatpush1.msra.mxu0 0.0
    %248 = vmatprep.subr.mxu0 0.0
    %249 = vmatpush1.msra.mxu0 0.0
    %250 = vmatprep.subr.mxu0 0.0
    %251 = vmatpush1.msra.mxu0 0.0
    %252 = vmatprep.subr.mxu0 0.0
    %253 = vmatpush1.msra.mxu0 0.0
    %254 = vmatprep.subr.mxu0 0.0
    %255 = vmatpush1.msra.mxu0 0.0
    %256 = vmatprep.subr.mxu0 0.0
    %257 = vmatpush1.msra.mxu0 0.0
    %258 = vmatprep.mubr.f32.mxu0 0.0
    %259 = vmatmul.mubr.f32.gmra.mrb[0].mxu0 %v170
    %v260 = vpop.f32.mrb[0].mxu0
    %v261 = vadd.f32 %v192, %v260
    %v262 = vpop.f32.mrb[0].mxu0
    %263 = vdwg.mxu0
    %v264 = vmax.f32 %v261, 0.0
    %v265 = vld [vmem:[%s4] sm:$0xff]
    %v266 = vld [vmem:[%s4 + $0x8] sm:$0xff]
    %v267 = vld [vmem:[%s4 + $0x10] sm:$0xff]
    %v268 = vld [vmem:[%s4 + $0x18] sm:$0xff]
    %v269 = vld [vmem:[%s4 + $0x20] sm:$0xff]
    %v270 = vld [vmem:[%s4 + $0x28] sm:$0xff]
    %v271 = vld [vmem:[%s4 + $0x30] sm:$0xff]
    %v272 = vld [vmem:[%s4 + $0x38] sm:$0xff]
    %v273 = vld [vmem:[%s4 + $0x40] sm:$0xff]
    %v274 = vld [vmem:[%s4 + $0x48] sm:$0xff]
    %v275 = vld [vmem:[%s4 + $0x50] sm:$0xff]
    %v276 = vld [vmem:[%s4 + $0x58] sm:$0xff]
    %v277 = vld [vmem:[%s4 + $0x60] sm:$0xff]
    %v278 = vld [vmem:[%s4 + $0x68] sm:$0xff]
    %v279 = vld [vmem:[%s4 + $0x70] sm:$0xff]
    %v280 = vld [vmem:[%s4 + $0x78] sm:$0xff]
    %v281 = vld [vmem:[%s5] sm:$0x1]
    %v283 = vlaneseq
    %v284 = vshrl.u32 %v283, 7
    %v285 = vsub.s32 0, %v284
    %v286 = vrot.slane %v281, %v285
    %288 = vmatprep.subr.mxu0 0.0
    %289 = vmatpush1.msra.mxu0 %v265
    %290 = vmatprep.subr.mxu0 0.0
    %291 = vmatpush1.msra.mxu0 %v266
    %292 = vmatprep.subr.mxu0 0.0
    %293 = vmatpush1.msra.mxu0 %v267
    %294 = vmatprep.subr.mxu0 0.0
    %295 = vmatpush1.msra.mxu0 %v268
    %296 = vmatprep.subr.mxu0 0.0
    %297 = vmatpush1.msra.mxu0 %v269
    %298 = vmatprep.subr.mxu0 0.0
    %299 = vmatpush1.msra.mxu0 %v270
    %300 = vmatprep.subr.mxu0 0.0
    %301 = vmatpush1.msra.mxu0 %v271
    %302 = vmatprep.subr.mxu0 0.0
    %303 = vmatpush1.msra.mxu0 %v272
    %304 = vmatprep.subr.mxu0 0.0
    %305 = vmatpush1.msra.mxu0 %v273
    %306 = vmatprep.subr.mxu0 0.0
    %307 = vmatpush1.msra.mxu0 %v274
    %308 = vmatprep.subr.mxu0 0.0
    %309 = vmatpush1.msra.mxu0 %v275
    %310 = vmatprep.subr.mxu0 0.0
    %311 = vmatpush1.msra.mxu0 %v276
    %312 = vmatprep.subr.mxu0 0.0
    %313 = vmatpush1.msra.mxu0 %v277
    %314 = vmatprep.subr.mxu0 0.0
    %315 = vmatpush1.msra.mxu0 %v278
    %316 = vmatprep.subr.mxu0 0.0
    %317 = vmatpush1.msra.mxu0 %v279
    %318 = vmatprep.subr.mxu0 0.0
    %319 = vmatpush1.msra.mxu0 %v280
    %320 = vmatprep.subr.mxu0 0.0
    %321 = vmatpush1.msra.mxu0 0.0
    %322 = vmatprep.subr.mxu0 0.0
    %323 = vmatpush1.msra.mxu0 0.0
    %324 = vmatprep.subr.mxu0 0.0
    %325 = vmatpush1.msra.mxu0 0.0
    %326 = vmatprep.subr.mxu0 0.0
    %327 = vmatpush1.msra.mxu0 0.0
    %328 = vmatprep.subr.mxu0 0.0
    %329 = vmatpush1.msra.mxu0 0.0
    %330 = vmatprep.subr.mxu0 0.0
    %331 = vmatpush1.msra.mxu0 0.0
    %332 = vmatprep.subr.mxu0 0.0
    %333 = vmatpush1.msra.mxu0 0.0
    %334 = vmatprep.subr.mxu0 0.0
    %335 = vmatpush1.msra.mxu0 0.0
    %336 = vmatprep.subr.mxu0 0.0
    %337 = vmatpush1.msra.mxu0 0.0
    %338 = vmatprep.subr.mxu0 0.0
    %339 = vmatpush1.msra.mxu0 0.0
    %340 = vmatprep.subr.mxu0 0.0
    %341 = vmatpush1.msra.mxu0 0.0
    %342 = vmatprep.subr.mxu0 0.0
    %343 = vmatpush1.msra.mxu0 0.0
    %344 = vmatprep.subr.mxu0 0.0
    %345 = vmatpush1.msra.mxu0 0.0
    %346 = vmatprep.subr.mxu0 0.0
    %347 = vmatpush1.msra.mxu0 0.0
    %348 = vmatprep.subr.mxu0 0.0
    %349 = vmatpush1.msra.mxu0 0.0
    %350 = vmatprep.subr.mxu0 0.0
    %351 = vmatpush1.msra.mxu0 0.0
    %352 = vmatprep.mubr.f32.mxu0 0.0
    %353 = vmatmul.mubr.f32.gmra.mrb[0].mxu0 %v264
    %v354 = vpop.f32.mrb[0].mxu0
    %v355 = vadd.f32 %v286, %v354
    %v356 = vpop.f32.mrb[0].mxu0
    %357 = vdwg.mxu0
    %358 = vst [vmem:[%s6] sm:$0xff] %v355
  $region33: #{gcnii_forward_pallas.9} parent=0 // pred_fallthru
    _
  // Predicated region
  $region34: #{gcnii_forward_pallas.9} parent=0 // pred_check
    _
  $region35: #{gcnii_forward_pallas.9} parent=0 // pred_check_branch
    %360 = sbr.rel (0) target = $region37
  $region36: #{gcnii_forward_pallas.9} parent=0 // pred_region
    _
  $region37: #{gcnii_forward_pallas.9} parent=0 // pred_fallthru
    _
  // Predicated region
  $region38: #{gcnii_forward_pallas.9} parent=0 // pred_check
    _
  $region39: #{gcnii_forward_pallas.9} parent=0 // pred_check_branch
    %362 = sbr.rel (0) target = $region41
  $region40: #{gcnii_forward_pallas.9} parent=0 // pred_region
    _
  $region41: #{gcnii_forward_pallas.9} parent=0 // pred_fallthru
    _

// kernel: gcnii_forward_pallas.6
$region0: #{gcnii_forward_pallas.6}
  #allocation0 [shape = 'u32[]', space=smem, size = 0x4, offset = 0x4, fixed_abs, tag = 'smem constant byte address 0x4 - core index']
  #allocation1 [shape = 'u32[144,128]{1,0:T(1,128)}', space=vmem, size = 0x12000, scoped, tag = 'internal scratch']
  %s0 = inlined_call_operand.vmem [shape: bf16[256,256], index: 0, kind: input, shape index: {}]
  %s1 = inlined_call_operand.vmem [shape: bf16[256,128], index: 1, kind: input, shape index: {}]
  %s2 = inlined_call_operand.vmem [shape: f32[256,128], index: 2, kind: input, shape index: {}]
  %s3 = inlined_call_operand.vmem [shape: bf16[128,128], index: 3, kind: input, shape index: {}]
  %s4 = inlined_call_operand.vmem [shape: bf16[256,128], index: 4, kind: output, shape index: {}]
  %s5 = sld [smem:[#allocation0]]
  $region49: #{gcnii_forward_pallas.6} parent=0
    _
  %s7 = ssub.s32 1, %s5
  %s8 = scalar_select 0, %s7, %s5
  loop: start=0, step=1, limit=4
  $region2: #{gcnii_forward_pallas.6} parent=0 // loop_pre_header
    _
  $region3: #{gcnii_forward_pallas.6} parent=0 // loop_header
    %s10 = sphi 0, %s14
    %p11 = scmp.ge.s32.totalorder %s10, 4
    %s20 = sphi 0, %s22
    %s23 = sphi 0, %s20
    %s24 = sphi 0, %s23
    %s40 = sphi 0, %s24
    %s44 = sphi 0, %s44
    %s46 = sphi 0, %s44
    %s47 = sphi 0, %s46
    %s61 = sphi 0, %s47
    %s67 = sphi 0, %s69
    %s70 = sphi 0, %s67
    %s71 = sphi 0, %s70
    %s87 = sphi 0, %s71
    %s91 = sphi 0, %s91
    %s93 = sphi 0, %s91
    %s94 = sphi 0, %s93
    %s108 = sphi 0, %s94
    %s114 = sphi 0, %s116
    %s117 = sphi 0, %s114
    %s118 = sphi 0, %s117
    %s134 = sphi 0, %s118
  $region4: #{gcnii_forward_pallas.6} parent=0 // loop_header_branch
    %13 = sbr.rel (%p11) target = $region8
  $region5: #{gcnii_forward_pallas.6} parent=0 // loop_body
    %s15 = ssub.s32 %s10, 1
    %s16 = ssub.s32 %s10, 2
    %s17 = sadd.s32 %s10, 1
    %s18 = ssub.s32 %s10, %s17
    %p19 = scmp.eq.s32.totalorder %s18, 0
    %s21 = sadd.s32 %s20, 1
    %s22 = scalar_select %p19, %s20, %s21
    %p25 = pneg %p19
    %p26 = scmp.eq.s32.totalorder %s10, 1
    %p27 = por %p25, %p26
    %p28 = scmp.ne.s32.totalorder %s20, %s23
    %p29 = scmp.eq.s32.totalorder %s10, 0
    %p30 = por %p28, %p29
    %p31 = scmp.ne.s32.totalorder %s20, %s23
    %p32 = scmp.eq.s32.totalorder %s15, 1
    %p33 = por %p31, %p32
    %p34 = scmp.ne.s32.totalorder %s23, %s24
    %p35 = scmp.eq.s32.totalorder %s15, 0
    %p36 = por %p34, %p35
    %p37 = scmp.ne.s32.totalorder %s23, %s24
    %p38 = scmp.eq.s32.totalorder %s16, 1
    %p39 = por %p37, %p38
    %p41 = scmp.ne.s32.totalorder %s24, %s40
    %p42 = scmp.eq.s32.totalorder %s16, 0
    %p43 = por %p41, %p42
    %s45 = sadd.s32 %s44, 1
    %p48 = scmp.eq.s32.totalorder %s10, 1
    %p49 = scmp.ne.s32.totalorder %s44, %s46
    %p50 = scmp.eq.s32.totalorder %s10, 0
    %p51 = por %p49, %p50
    %p52 = scmp.ne.s32.totalorder %s44, %s46
    %p53 = scmp.eq.s32.totalorder %s15, 1
    %p54 = por %p52, %p53
    %p55 = scmp.ne.s32.totalorder %s46, %s47
    %p56 = scmp.eq.s32.totalorder %s15, 0
    %p57 = por %p55, %p56
    %p58 = scmp.ne.s32.totalorder %s46, %s47
    %p59 = scmp.eq.s32.totalorder %s16, 1
    %p60 = por %p58, %p59
    %p62 = scmp.ne.s32.totalorder %s47, %s61
    %p63 = scmp.eq.s32.totalorder %s16, 0
    %p64 = por %p62, %p63
    %s65 = ssub.s32 %s10, %s17
    %p66 = scmp.eq.s32.totalorder %s65, 0
    %s68 = sadd.s32 %s67, 1
    %s69 = scalar_select %p66, %s67, %s68
    %p72 = pneg %p66
    %p73 = scmp.eq.s32.totalorder %s10, 1
    %p74 = por %p72, %p73
    %p75 = scmp.ne.s32.totalorder %s67, %s70
    %p76 = scmp.eq.s32.totalorder %s10, 0
    %p77 = por %p75, %p76
    %p78 = scmp.ne.s32.totalorder %s67, %s70
    %p79 = scmp.eq.s32.totalorder %s15, 1
    %p80 = por %p78, %p79
    %p81 = scmp.ne.s32.totalorder %s70, %s71
    %p82 = scmp.eq.s32.totalorder %s15, 0
    %p83 = por %p81, %p82
    %p84 = scmp.ne.s32.totalorder %s70, %s71
    %p85 = scmp.eq.s32.totalorder %s16, 1
    %p86 = por %p84, %p85
    %p88 = scmp.ne.s32.totalorder %s71, %s87
    %p89 = scmp.eq.s32.totalorder %s16, 0
    %p90 = por %p88, %p89
    %s92 = sadd.s32 %s91, 1
    %p95 = scmp.eq.s32.totalorder %s10, 1
    %p96 = scmp.ne.s32.totalorder %s91, %s93
    %p97 = scmp.eq.s32.totalorder %s10, 0
    %p98 = por %p96, %p97
    %p99 = scmp.ne.s32.totalorder %s91, %s93
    %p100 = scmp.eq.s32.totalorder %s15, 1
    %p101 = por %p99, %p100
    %p102 = scmp.ne.s32.totalorder %s93, %s94
    %p103 = scmp.eq.s32.totalorder %s15, 0
    %p104 = por %p102, %p103
    %p105 = scmp.ne.s32.totalorder %s93, %s94
    %p106 = scmp.eq.s32.totalorder %s16, 1
    %p107 = por %p105, %p106
    %p109 = scmp.ne.s32.totalorder %s94, %s108
    %p110 = scmp.eq.s32.totalorder %s16, 0
    %p111 = por %p109, %p110
    %s112 = ssub.s32 %s10, %s17
    %p113 = scmp.eq.s32.totalorder %s112, 0
    %s115 = sadd.s32 %s114, 1
    %s116 = scalar_select %p113, %s114, %s115
    %p119 = pneg %p113
    %p120 = scmp.eq.s32.totalorder %s10, 1
    %p121 = por %p119, %p120
    %p122 = scmp.ne.s32.totalorder %s114, %s117
    %p123 = scmp.eq.s32.totalorder %s10, 0
    %p124 = por %p122, %p123
    %p125 = scmp.ne.s32.totalorder %s114, %s117
    %p126 = scmp.eq.s32.totalorder %s15, 1
    %p127 = por %p125, %p126
    %p128 = scmp.ne.s32.totalorder %s117, %s118
    %p129 = scmp.eq.s32.totalorder %s15, 0
    %p130 = por %p128, %p129
    %p131 = scmp.ne.s32.totalorder %s117, %s118
    %p132 = scmp.eq.s32.totalorder %s16, 1
    %p133 = por %p131, %p132
    %p135 = scmp.ne.s32.totalorder %s118, %s134
    %p136 = scmp.eq.s32.totalorder %s16, 0
    %p137 = por %p135, %p136
    %p138 = scmp.le.s32.totalorder 1, %s10
    %p139 = scmp.lt.s32.totalorder %s10, 3
    %p140 = pnand %p138, %p139
    %p141 = pneg %p140
    // Predicated region
    $region9: #{gcnii_forward_pallas.6} parent=5 // pred_check
      _
    $region10: #{gcnii_forward_pallas.6} parent=5 // pred_check_branch
      %143 = sbr.rel (%p140) target = $region12
    $region11: #{gcnii_forward_pallas.6} parent=5 // pred_region
      %s144 = ssub.s32 %s10, 1
      // Predicated region
      $region13: #{gcnii_forward_pallas.6} parent=11 // pred_check
        %p145 = pneg %p57
      $region14: #{gcnii_forward_pallas.6} parent=11 // pred_check_branch
        %147 = sbr.rel (%p145) target = $region16
      $region15: #{gcnii_forward_pallas.6} parent=11 // pred_region
        _
      $region16: #{gcnii_forward_pallas.6} parent=11 // pred_fallthru
        _
      // Predicated region
      $region17: #{gcnii_forward_pallas.6} parent=11 // pred_check
        %p148 = pneg %p104
      $region18: #{gcnii_forward_pallas.6} parent=11 // pred_check_branch
        %150 = sbr.rel (%p148) target = $region20
      $region19: #{gcnii_forward_pallas.6} parent=11 // pred_region
        _
      $region20: #{gcnii_forward_pallas.6} parent=11 // pred_fallthru
        _
    $region12: #{gcnii_forward_pallas.6} parent=5 // pred_fallthru
      _
    %p151 = scmp.lt.s32.totalorder %s10, 2
    // Predicated region
    $region21: #{gcnii_forward_pallas.6} parent=5 // pred_check
      %p152 = pneg %p151
    $region22: #{gcnii_forward_pallas.6} parent=5 // pred_check_branch
      %154 = sbr.rel (%p152) target = $region24
    $region23: #{gcnii_forward_pallas.6} parent=5 // pred_region
      // Predicated region
      $region25: #{gcnii_forward_pallas.6} parent=23 // pred_check
        %p155 = pneg %p30
      $region26: #{gcnii_forward_pallas.6} parent=23 // pred_check_branch
        %157 = sbr.rel (%p155) target = $region28
      $region27: #{gcnii_forward_pallas.6} parent=23 // pred_region
        %s158 = smul.u32 16, %s10
        %p159 = scmp.lt.s32.totalorder %s158, 31
        %s160 = scalar_select %p159, %s158, 31
        %s161 = smul.addr %s160, 2
        %s162 = smul.addr %s161, 4
        %s163 = scalar_lea.vmem %s0, %s162
        %s164 = smul.u32 16, %s10
      $region28: #{gcnii_forward_pallas.6} parent=23 // pred_fallthru
        _
      // Predicated region
      $region29: #{gcnii_forward_pallas.6} parent=23 // pred_check
        %p165 = pneg %p77
      $region30: #{gcnii_forward_pallas.6} parent=23 // pred_check_branch
        %167 = sbr.rel (%p165) target = $region32
      $region31: #{gcnii_forward_pallas.6} parent=23 // pred_region
        %s168 = smul.u32 16, %s10
        %p169 = scmp.lt.s32.totalorder %s168, 31
        %s170 = scalar_select %p169, %s168, 31
        %s171 = smul.addr %s170, 8
        %s172 = scalar_lea.vmem %s2, %s171
        %s173 = smul.u32 16, %s10
      $region32: #{gcnii_forward_pallas.6} parent=23 // pred_fallthru
        _
    $region24: #{gcnii_forward_pallas.6} parent=5 // pred_fallthru
      _
    %p174 = scmp.le.s32.totalorder 1, %s10
    %p175 = scmp.lt.s32.totalorder %s10, 3
    %p176 = pnand %p174, %p175
    %p177 = pneg %p176
    // Predicated region
    $region33: #{gcnii_forward_pallas.6} parent=5 // pred_check
      _
    $region34: #{gcnii_forward_pallas.6} parent=5 // pred_check_branch
      %179 = sbr.rel (%p176) target = $region36
    $region35: #{gcnii_forward_pallas.6} parent=5 // pred_region
      %s180 = ssub.s32 %s10, 1
      %s181 = smul.u32 16, %s15
      %p182 = scmp.lt.s32.totalorder %s181, 31
      %s183 = scalar_select %p182, %s181, 31
      %s184 = smul.addr %s183, 2
      %s185 = smul.addr %s184, 4
      %s186 = scalar_lea.vmem %s0, %s185
      %p187 = pneg %p36
      %p188 = pneg %p33
      %p189 = pneg %p57
      %p190 = pneg %p54
      %s191 = smul.u32 16, %s15
      %p192 = scmp.lt.s32.totalorder %s191, 31
      %s193 = scalar_select %p192, %s191, 31
      %s194 = smul.addr %s193, 8
      %s195 = scalar_lea.vmem %s2, %s194
      %p196 = pneg %p83
      %p197 = pneg %p80
      %p198 = pneg %p104
      %p199 = pneg %p101
      %p200 = pneg %p130
      %p201 = pneg %p127
      %s202 = smul.u32 16, %s15
      %p203 = scmp.lt.s32.totalorder %s202, 31
      %s204 = scalar_select %p203, %s202, 31
      %s205 = smul.addr %s204, 4
      %s206 = scalar_lea.vmem %s4, %s205
      %s207 = smul.u32 16, %s15
      %p208 = scmp.lt.s32.totalorder %s207, 31
      %s209 = scalar_select %p208, %s207, 31
      %s210 = smul.addr %s209, 2
      %s211 = smul.addr %s210, 4
      %s212 = scalar_lea.vmem %s0, %s211
      %s213 = smul.u32 16, %s15
      %s214 = smul.u32 16, %s15
      %p215 = scmp.lt.s32.totalorder %s214, 31
      %s216 = scalar_select %p215, %s214, 31
      %s217 = smul.addr %s216, 8
      %s218 = scalar_lea.vmem %s2, %s217
      %s219 = smul.u32 16, %s15
      %s220 = smul.u32 16, %s15
      %p221 = scmp.lt.s32.totalorder %s220, 31
      %s222 = scalar_select %p221, %s220, 31
      %s223 = smul.addr %s222, 4
      %s224 = scalar_lea.vmem %s4, %s223
      %s225 = smul.u32 16, %s15
      %v227 = vld [vmem:[%s212] sm:$0xff]
      %v228 = vld [vmem:[%s212 + $0x8] sm:$0xff]
      %v229 = vld [vmem:[%s212 + $0x10] sm:$0xff]
      %v230 = vld [vmem:[%s212 + $0x18] sm:$0xff]
      %v231 = vld [vmem:[%s212 + $0x20] sm:$0xff]
      %v232 = vld [vmem:[%s212 + $0x28] sm:$0xff]
      %v233 = vld [vmem:[%s212 + $0x30] sm:$0xff]
      %v234 = vld [vmem:[%s212 + $0x38] sm:$0xff]
      %v235 = vld [vmem:[%s212 + $0x40] sm:$0xff]
      %v236 = vld [vmem:[%s212 + $0x48] sm:$0xff]
      %v237 = vld [vmem:[%s212 + $0x50] sm:$0xff]
      %v238 = vld [vmem:[%s212 + $0x58] sm:$0xff]
      %v239 = vld [vmem:[%s212 + $0x60] sm:$0xff]
      %v240 = vld [vmem:[%s212 + $0x68] sm:$0xff]
      %v241 = vld [vmem:[%s212 + $0x70] sm:$0xff]
      %v242 = vld [vmem:[%s212 + $0x78] sm:$0xff]
      %v243 = vld [vmem:[%s1] sm:$0xf]
      %v244 = vld [vmem:[%s1 + $0x4] sm:$0xf]
      %v245 = vld [vmem:[%s1 + $0x8] sm:$0xf]
      %v246 = vld [vmem:[%s1 + $0xc] sm:$0xf]
      %v247 = vld [vmem:[%s1 + $0x10] sm:$0xf]
      %v248 = vld [vmem:[%s1 + $0x14] sm:$0xf]
      %v249 = vld [vmem:[%s1 + $0x18] sm:$0xf]
      %v250 = vld [vmem:[%s1 + $0x1c] sm:$0xf]
      %v251 = vld [vmem:[%s1 + $0x20] sm:$0xf]
      %v252 = vld [vmem:[%s1 + $0x24] sm:$0xf]
      %v253 = vld [vmem:[%s1 + $0x28] sm:$0xf]
      %v254 = vld [vmem:[%s1 + $0x2c] sm:$0xf]
      %v255 = vld [vmem:[%s1 + $0x30] sm:$0xf]
      %v256 = vld [vmem:[%s1 + $0x34] sm:$0xf]
      %v257 = vld [vmem:[%s1 + $0x38] sm:$0xf]
      %v258 = vld [vmem:[%s1 + $0x3c] sm:$0xf]
      %v259 = vld [vmem:[%s1 + $0x40] sm:$0xf]
      %v260 = vld [vmem:[%s1 + $0x44] sm:$0xf]
      %v261 = vld [vmem:[%s1 + $0x48] sm:$0xf]
      %v262 = vld [vmem:[%s1 + $0x4c] sm:$0xf]
      %v263 = vld [vmem:[%s1 + $0x50] sm:$0xf]
      %v264 = vld [vmem:[%s1 + $0x54] sm:$0xf]
      %v265 = vld [vmem:[%s1 + $0x58] sm:$0xf]
      %v266 = vld [vmem:[%s1 + $0x5c] sm:$0xf]
      %v267 = vld [vmem:[%s1 + $0x60] sm:$0xf]
      %v268 = vld [vmem:[%s1 + $0x64] sm:$0xf]
      %v269 = vld [vmem:[%s1 + $0x68] sm:$0xf]
      %v270 = vld [vmem:[%s1 + $0x6c] sm:$0xf]
      %v271 = vld [vmem:[%s1 + $0x70] sm:$0xf]
      %v272 = vld [vmem:[%s1 + $0x74] sm:$0xf]
      %v273 = vld [vmem:[%s1 + $0x78] sm:$0xf]
      %v274 = vld [vmem:[%s1 + $0x7c] sm:$0xf]
      %v291 = vunpack.c.l.b16 %v227
      %v292 = vunpack.c.h.b16 %v227
      %v293 = vunpack.c.l.b16 %v228
      %v294 = vunpack.c.h.b16 %v228
      %v295 = vunpack.c.l.b16 %v229
      %v296 = vunpack.c.h.b16 %v229
      %v297 = vunpack.c.l.b16 %v230
      %v298 = vunpack.c.h.b16 %v230
      %v299 = vunpack.c.l.b16 %v231
      %v300 = vunpack.c.h.b16 %v231
      %v301 = vunpack.c.l.b16 %v232
      %v302 = vunpack.c.h.b16 %v232
      %v303 = vunpack.c.l.b16 %v233
      %v304 = vunpack.c.h.b16 %v233
      %v305 = vunpack.c.l.b16 %v234
      %v306 = vunpack.c.h.b16 %v234
      %v307 = vunpack.c.l.b16 %v235
      %v308 = vunpack.c.h.b16 %v235
      %v309 = vunpack.c.l.b16 %v236
      %v310 = vunpack.c.h.b16 %v236
      %v311 = vunpack.c.l.b16 %v237
      %v312 = vunpack.c.h.b16 %v237
      %v313 = vunpack.c.l.b16 %v238
      %v314 = vunpack.c.h.b16 %v238
      %v315 = vunpack.c.l.b16 %v239
      %v316 = vunpack.c.h.b16 %v239
      %v317 = vunpack.c.l.b16 %v240
      %v318 = vunpack.c.h.b16 %v240
      %v319 = vunpack.c.l.b16 %v241
      %v320 = vunpack.c.h.b16 %v241
      %v321 = vunpack.c.l.b16 %v242
      %v322 = vunpack.c.h.b16 %v242
      %v323 = vpack.c.b16 %v293, %v291
      %v324 = vpack.c.b16 %v294, %v292
      %v325 = vpack.c.b16 %v297, %v295
      %v326 = vpack.c.b16 %v298, %v296
      %v327 = vpack.c.b16 %v301, %v299
      %v328 = vpack.c.b16 %v302, %v300
      %v329 = vpack.c.b16 %v305, %v303
      %v330 = vpack.c.b16 %v306, %v304
      %v331 = vpack.c.b16 %v309, %v307
      %v332 = vpack.c.b16 %v310, %v308
      %v333 = vpack.c.b16 %v313, %v311
      %v334 = vpack.c.b16 %v314, %v312
      %v335 = vpack.c.b16 %v317, %v315
      %v336 = vpack.c.b16 %v318, %v316
      %v337 = vpack.c.b16 %v321, %v319
      %v338 = vpack.c.b16 %v322, %v320
      %v387 = vunpack.c.l.b16 %v243
      %v388 = vunpack.c.l.b16 %v244
      %v389 = vunpack.c.l.b16 %v245
      %v390 = vunpack.c.l.b16 %v246
      %v391 = vunpack.c.l.b16 %v247
      %v392 = vunpack.c.l.b16 %v248
      %v393 = vunpack.c.l.b16 %v249
      %v394 = vunpack.c.l.b16 %v250
      %v395 = vunpack.c.l.b16 %v251
      %v396 = vunpack.c.l.b16 %v252
      %v397 = vunpack.c.l.b16 %v253
      %v398 = vunpack.c.l.b16 %v254
      %v399 = vunpack.c.l.b16 %v255
      %v400 = vunpack.c.l.b16 %v256
      %v401 = vunpack.c.l.b16 %v257
      %v402 = vunpack.c.l.b16 %v258
      %v403 = vunpack.c.l.b16 %v259
      %v404 = vunpack.c.l.b16 %v260
      %v405 = vunpack.c.l.b16 %v261
      %v406 = vunpack.c.l.b16 %v262
      %v407 = vunpack.c.l.b16 %v263
      %v408 = vunpack.c.l.b16 %v264
      %v409 = vunpack.c.l.b16 %v265
      %v410 = vunpack.c.l.b16 %v266
      %v411 = vunpack.c.l.b16 %v267
      %v412 = vunpack.c.l.b16 %v268
      %v413 = vunpack.c.l.b16 %v269
      %v414 = vunpack.c.l.b16 %v270
      %v415 = vunpack.c.l.b16 %v271
      %v416 = vunpack.c.l.b16 %v272
      %v417 = vunpack.c.l.b16 %v273
      %v418 = vunpack.c.l.b16 %v274
      %v419 = vpack.c.b16 %v388, %v387
      %v420 = vpack.c.b16 %v390, %v389
      %v421 = vpack.c.b16 %v392, %v391
      %v422 = vpack.c.b16 %v394, %v393
      %v423 = vpack.c.b16 %v396, %v395
      %v424 = vpack.c.b16 %v398, %v397
      %v425 = vpack.c.b16 %v400, %v399
      %v426 = vpack.c.b16 %v402, %v401
      %v427 = vpack.c.b16 %v404, %v403
      %v428 = vpack.c.b16 %v406, %v405
      %v429 = vpack.c.b16 %v408, %v407
      %v430 = vpack.c.b16 %v410, %v409
      %v431 = vpack.c.b16 %v412, %v411
      %v432 = vpack.c.b16 %v414, %v413
      %v433 = vpack.c.b16 %v416, %v415
      %v434 = vpack.c.b16 %v418, %v417
      %451 = vmatprep.subr.bf16.mxu0 0
      %452 = vmatpush1.bf16.msra.mxu0 %v419
      %453 = vmatprep.subr.bf16.mxu0 0
      %454 = vmatpush1.bf16.msra.mxu0 %v420
      %455 = vmatprep.subr.bf16.mxu0 0
      %456 = vmatpush1.bf16.msra.mxu0 %v421
      %457 = vmatprep.subr.bf16.mxu0 0
      %458 = vmatpush1.bf16.msra.mxu0 %v422
      %459 = vmatprep.subr.bf16.mxu0 0
      %460 = vmatpush1.bf16.msra.mxu0 %v423
      %461 = vmatprep.subr.bf16.mxu0 0
      %462 = vmatpush1.bf16.msra.mxu0 %v424
      %463 = vmatprep.subr.bf16.mxu0 0
      %464 = vmatpush1.bf16.msra.mxu0 %v425
      %465 = vmatprep.subr.bf16.mxu0 0
      %466 = vmatpush1.bf16.msra.mxu0 %v426
      %467 = vmatprep.subr.bf16.mxu0 0
      %468 = vmatpush1.bf16.msra.mxu0 %v427
      %469 = vmatprep.subr.bf16.mxu0 0
      %470 = vmatpush1.bf16.msra.mxu0 %v428
      %471 = vmatprep.subr.bf16.mxu0 0
      %472 = vmatpush1.bf16.msra.mxu0 %v429
      %473 = vmatprep.subr.bf16.mxu0 0
      %474 = vmatpush1.bf16.msra.mxu0 %v430
      %475 = vmatprep.subr.bf16.mxu0 0
      %476 = vmatpush1.bf16.msra.mxu0 %v431
      %477 = vmatprep.subr.bf16.mxu0 0
      %478 = vmatpush1.bf16.msra.mxu0 %v432
      %479 = vmatprep.subr.bf16.mxu0 0
      %480 = vmatpush1.bf16.msra.mxu0 %v433
      %481 = vmatprep.subr.bf16.mxu0 0
      %482 = vmatpush1.bf16.msra.mxu0 %v434
      %483 = vmatprep.mubr.bf16.mxu0 %v324
      %484 = vmatmul.mubr.bf16.gmra.mrb[0].mxu0 %v323
      %v485 = vpop.f32.mrb[0].mxu0
      %v486 = vadd.f32 0.0, %v485
      %v487 = vpop.f32.mrb[0].mxu0
      %v488 = vpop.f32.mrb[0].mxu0
      %v489 = vadd.f32 0.0, %v488
      %v490 = vpop.f32.mrb[0].mxu0
      %491 = vmatprep.mubr.bf16.mxu0 %v326
      %492 = vmatmul.mubr.bf16.gmra.mrb[0].mxu0 %v325
      %v493 = vpop.f32.mrb[0].mxu0
      %v494 = vadd.f32 0.0, %v493
      %v495 = vpop.f32.mrb[0].mxu0
      %v496 = vpop.f32.mrb[0].mxu0
      %v497 = vadd.f32 0.0, %v496
      %v498 = vpop.f32.mrb[0].mxu0
      %499 = vmatprep.mubr.bf16.mxu0 %v328
      %500 = vmatmul.mubr.bf16.gmra.mrb[0].mxu0 %v327
      %v501 = vpop.f32.mrb[0].mxu0
      %v502 = vadd.f32 0.0, %v501
      %v503 = vpop.f32.mrb[0].mxu0
      %v504 = vpop.f32.mrb[0].mxu0
      %v505 = vadd.f32 0.0, %v504
      %v506 = vpop.f32.mrb[0].mxu0
      %507 = vmatprep.mubr.bf16.mxu0 %v330
      %508 = vmatmul.mubr.bf16.gmra.mrb[0].mxu0 %v329
      %v509 = vpop.f32.mrb[0].mxu0
      %v510 = vadd.f32 0.0, %v509
      %v511 = vpop.f32.mrb[0].mxu0
      %v512 = vpop.f32.mrb[0].mxu0
      %v513 = vadd.f32 0.0, %v512
      %v514 = vpop.f32.mrb[0].mxu0
      %515 = vmatprep.mubr.bf16.mxu0 %v332
      %516 = vmatmul.mubr.bf16.gmra.mrb[0].mxu0 %v331
      %v517 = vpop.f32.mrb[0].mxu0
      %v518 = vadd.f32 0.0, %v517
      %v519 = vpop.f32.mrb[0].mxu0
      %v520 = vpop.f32.mrb[0].mxu0
      %v521 = vadd.f32 0.0, %v520
      %v522 = vpop.f32.mrb[0].mxu0
      %523 = vmatprep.mubr.bf16.mxu0 %v334
      %524 = vmatmul.mubr.bf16.gmra.mrb[0].mxu0 %v333
      %v525 = vpop.f32.mrb[0].mxu0
      %v526 = vadd.f32 0.0, %v525
      %v527 = vpop.f32.mrb[0].mxu0
      %v528 = vpop.f32.mrb[0].mxu0
      %v529 = vadd.f32 0.0, %v528
      %v530 = vpop.f32.mrb[0].mxu0
      %531 = vmatprep.mubr.bf16.mxu0 %v336
      %532 = vmatmul.mubr.bf16.gmra.mrb[0].mxu0 %v335
      %v533 = vpop.f32.mrb[0].mxu0
      %v534 = vadd.f32 0.0, %v533
      %v535 = vpop.f32.mrb[0].mxu0
      %v536 = vpop.f32.mrb[0].mxu0
      %v537 = vadd.f32 0.0, %v536
      %v538 = vpop.f32.mrb[0].mxu0
      %539 = vmatprep.mubr.bf16.mxu0 %v338
      %540 = vmatmul.mubr.bf16.gmra.mrb[0].mxu0 %v337
      %v541 = vpop.f32.mrb[0].mxu0
      %v542 = vadd.f32 0.0, %v541
      %v543 = vpop.f32.mrb[0].mxu0
      %v544 = vpop.f32.mrb[0].mxu0
      %v545 = vadd.f32 0.0, %v544
      %v546 = vpop.f32.mrb[0].mxu0
      %547 = vdwg.mxu0
      %v548 = vmul.f32 %v486, 0.5
      %v549 = vmul.f32 %v489, 0.5
      %v550 = vmul.f32 %v494, 0.5
      %v551 = vmul.f32 %v497, 0.5
      %v552 = vmul.f32 %v502, 0.5
      %v553 = vmul.f32 %v505, 0.5
      %v554 = vmul.f32 %v510, 0.5
      %v555 = vmul.f32 %v513, 0.5
      %v556 = vmul.f32 %v518, 0.5
      %v557 = vmul.f32 %v521, 0.5
      %v558 = vmul.f32 %v526, 0.5
      %v559 = vmul.f32 %v529, 0.5
      %v560 = vmul.f32 %v534, 0.5
      %v561 = vmul.f32 %v537, 0.5
      %v562 = vmul.f32 %v542, 0.5
      %v563 = vmul.f32 %v545, 0.5
      %v564 = vld [vmem:[%s218] sm:$0xff]
      %v565 = vld [vmem:[%s218 + $0x8] sm:$0xff]
      %v566 = vld [vmem:[%s218 + $0x10] sm:$0xff]
      %v567 = vld [vmem:[%s218 + $0x18] sm:$0xff]
      %v568 = vld [vmem:[%s218 + $0x20] sm:$0xff]
      %v569 = vld [vmem:[%s218 + $0x28] sm:$0xff]
      %v570 = vld [vmem:[%s218 + $0x30] sm:$0xff]
      %v571 = vld [vmem:[%s218 + $0x38] sm:$0xff]
      %v572 = vld [vmem:[%s218 + $0x40] sm:$0xff]
      %v573 = vld [vmem:[%s218 + $0x48] sm:$0xff]
      %v574 = vld [vmem:[%s218 + $0x50] sm:$0xff]
      %v575 = vld [vmem:[%s218 + $0x58] sm:$0xff]
      %v576 = vld [vmem:[%s218 + $0x60] sm:$0xff]
      %v577 = vld [vmem:[%s218 + $0x68] sm:$0xff]
      %v578 = vld [vmem:[%s218 + $0x70] sm:$0xff]
      %v579 = vld [vmem:[%s218 + $0x78] sm:$0xff]
      %v580 = vadd.f32 %v548, %v564
      %v581 = vadd.f32 %v549, %v565
      %v582 = vadd.f32 %v550, %v566
      %v583 = vadd.f32 %v551, %v567
      %v584 = vadd.f32 %v552, %v568
      %v585 = vadd.f32 %v553, %v569
      %v586 = vadd.f32 %v554, %v570
      %v587 = vadd.f32 %v555, %v571
      %v588 = vadd.f32 %v556, %v572
      %v589 = vadd.f32 %v557, %v573
      %v590 = vadd.f32 %v558, %v574
      %v591 = vadd.f32 %v559, %v575
      %v592 = vadd.f32 %v560, %v576
      %v593 = vadd.f32 %v561, %v577
      %v594 = vadd.f32 %v562, %v578
      %v595 = vadd.f32 %v563, %v579
      %v596 = vpack.c.bf16 %v581, %v580
      %v597 = vpack.c.bf16 %v583, %v582
      %v598 = vpack.c.bf16 %v585, %v584
      %v599 = vpack.c.bf16 %v587, %v586
      %v600 = vpack.c.bf16 %v589, %v588
      %v601 = vpack.c.bf16 %v591, %v590
      %v602 = vpack.c.bf16 %v593, %v592
      %v603 = vpack.c.bf16 %v595, %v594
      %v604 = vld [vmem:[%s3] sm:$0xf]
      %v605 = vld [vmem:[%s3 + $0x4] sm:$0xf]
      %v606 = vld [vmem:[%s3 + $0x8] sm:$0xf]
      %v607 = vld [vmem:[%s3 + $0xc] sm:$0xf]
      %v608 = vld [vmem:[%s3 + $0x10] sm:$0xf]
      %v609 = vld [vmem:[%s3 + $0x14] sm:$0xf]
      %v610 = vld [vmem:[%s3 + $0x18] sm:$0xf]
      %v611 = vld [vmem:[%s3 + $0x1c] sm:$0xf]
      %v612 = vld [vmem:[%s3 + $0x20] sm:$0xf]
      %v613 = vld [vmem:[%s3 + $0x24] sm:$0xf]
      %v614 = vld [vmem:[%s3 + $0x28] sm:$0xf]
      %v615 = vld [vmem:[%s3 + $0x2c] sm:$0xf]
      %v616 = vld [vmem:[%s3 + $0x30] sm:$0xf]
      %v617 = vld [vmem:[%s3 + $0x34] sm:$0xf]
      %v618 = vld [vmem:[%s3 + $0x38] sm:$0xf]
      %v619 = vld [vmem:[%s3 + $0x3c] sm:$0xf]
      %v636 = vunpack.c.l.b16 %v604
      %v637 = vunpack.c.l.b16 %v605
      %v638 = vunpack.c.l.b16 %v606
      %v639 = vunpack.c.l.b16 %v607
      %v640 = vunpack.c.l.b16 %v608
      %v641 = vunpack.c.l.b16 %v609
      %v642 = vunpack.c.l.b16 %v610
      %v643 = vunpack.c.l.b16 %v611
      %v644 = vunpack.c.l.b16 %v612
      %v645 = vunpack.c.l.b16 %v613
      %v646 = vunpack.c.l.b16 %v614
      %v647 = vunpack.c.l.b16 %v615
      %v648 = vunpack.c.l.b16 %v616
      %v649 = vunpack.c.l.b16 %v617
      %v650 = vunpack.c.l.b16 %v618
      %v651 = vunpack.c.l.b16 %v619
      %v652 = vpack.c.b16 %v637, %v636
      %v653 = vpack.c.b16 %v639, %v638
      %v654 = vpack.c.b16 %v641, %v640
      %v655 = vpack.c.b16 %v643, %v642
      %v656 = vpack.c.b16 %v645, %v644
      %v657 = vpack.c.b16 %v647, %v646
      %v658 = vpack.c.b16 %v649, %v648
      %v659 = vpack.c.b16 %v651, %v650
      %668 = vmatprep.subr.bf16.mxu0 0
      %669 = vmatpush1.bf16.msra.mxu0 %v652
      %670 = vmatprep.subr.bf16.mxu0 0
      %671 = vmatpush1.bf16.msra.mxu0 %v653
      %672 = vmatprep.subr.bf16.mxu0 0
      %673 = vmatpush1.bf16.msra.mxu0 %v654
      %674 = vmatprep.subr.bf16.mxu0 0
      %675 = vmatpush1.bf16.msra.mxu0 %v655
      %676 = vmatprep.subr.bf16.mxu0 0
      %677 = vmatpush1.bf16.msra.mxu0 %v656
      %678 = vmatprep.subr.bf16.mxu0 0
      %679 = vmatpush1.bf16.msra.mxu0 %v657
      %680 = vmatprep.subr.bf16.mxu0 0
      %681 = vmatpush1.bf16.msra.mxu0 %v658
      %682 = vmatprep.subr.bf16.mxu0 0
      %683 = vmatpush1.bf16.msra.mxu0 %v659
      %684 = vmatprep.subr.bf16.mxu0 0
      %685 = vmatpush1.bf16.msra.mxu0 0
      %686 = vmatprep.subr.bf16.mxu0 0
      %687 = vmatpush1.bf16.msra.mxu0 0
      %688 = vmatprep.subr.bf16.mxu0 0
      %689 = vmatpush1.bf16.msra.mxu0 0
      %690 = vmatprep.subr.bf16.mxu0 0
      %691 = vmatpush1.bf16.msra.mxu0 0
      %692 = vmatprep.subr.bf16.mxu0 0
      %693 = vmatpush1.bf16.msra.mxu0 0
      %694 = vmatprep.subr.bf16.mxu0 0
      %695 = vmatpush1.bf16.msra.mxu0 0
      %696 = vmatprep.subr.bf16.mxu0 0
      %697 = vmatpush1.bf16.msra.mxu0 0
      %698 = vmatprep.subr.bf16.mxu0 0
      %699 = vmatpush1.bf16.msra.mxu0 0
      %700 = vmatprep.mubr.bf16.mxu0 0
      %701 = vmatmul.mubr.bf16.gmra.mrb[0].mxu0 %v596
      %v702 = vpop.f32.mrb[0].mxu0
      %v703 = vadd.f32 0.0, %v702
      %v704 = vpop.f32.mrb[0].mxu0
      %v705 = vpop.f32.mrb[0].mxu0
      %v706 = vadd.f32 0.0, %v705
      %v707 = vpop.f32.mrb[0].mxu0
      %708 = vmatprep.mubr.bf16.mxu0 0
      %709 = vmatmul.mubr.bf16.gmra.mrb[0].mxu0 %v597
      %v710 = vpop.f32.mrb[0].mxu0
      %v711 = vadd.f32 0.0, %v710
      %v712 = vpop.f32.mrb[0].mxu0
      %v713 = vpop.f32.mrb[0].mxu0
      %v714 = vadd.f32 0.0, %v713
      %v715 = vpop.f32.mrb[0].mxu0
      %716 = vmatprep.mubr.bf16.mxu0 0
      %717 = vmatmul.mubr.bf16.gmra.mrb[0].mxu0 %v598
      %v718 = vpop.f32.mrb[0].mxu0
      %v719 = vadd.f32 0.0, %v718
      %v720 = vpop.f32.mrb[0].mxu0
      %v721 = vpop.f32.mrb[0].mxu0
      %v722 = vadd.f32 0.0, %v721
      %v723 = vpop.f32.mrb[0].mxu0
      %724 = vmatprep.mubr.bf16.mxu0 0
      %725 = vmatmul.mubr.bf16.gmra.mrb[0].mxu0 %v599
      %v726 = vpop.f32.mrb[0].mxu0
      %v727 = vadd.f32 0.0, %v726
      %v728 = vpop.f32.mrb[0].mxu0
      %v729 = vpop.f32.mrb[0].mxu0
      %v730 = vadd.f32 0.0, %v729
      %v731 = vpop.f32.mrb[0].mxu0
      %732 = vmatprep.mubr.bf16.mxu0 0
      %733 = vmatmul.mubr.bf16.gmra.mrb[0].mxu0 %v600
      %v734 = vpop.f32.mrb[0].mxu0
      %v735 = vadd.f32 0.0, %v734
      %v736 = vpop.f32.mrb[0].mxu0
      %v737 = vpop.f32.mrb[0].mxu0
      %v738 = vadd.f32 0.0, %v737
      %v739 = vpop.f32.mrb[0].mxu0
      %740 = vmatprep.mubr.bf16.mxu0 0
      %741 = vmatmul.mubr.bf16.gmra.mrb[0].mxu0 %v601
      %v742 = vpop.f32.mrb[0].mxu0
      %v743 = vadd.f32 0.0, %v742
      %v744 = vpop.f32.mrb[0].mxu0
      %v745 = vpop.f32.mrb[0].mxu0
      %v746 = vadd.f32 0.0, %v745
      %v747 = vpop.f32.mrb[0].mxu0
      %748 = vmatprep.mubr.bf16.mxu0 0
      %749 = vmatmul.mubr.bf16.gmra.mrb[0].mxu0 %v602
      %v750 = vpop.f32.mrb[0].mxu0
      %v751 = vadd.f32 0.0, %v750
      %v752 = vpop.f32.mrb[0].mxu0
      %v753 = vpop.f32.mrb[0].mxu0
      %v754 = vadd.f32 0.0, %v753
      %v755 = vpop.f32.mrb[0].mxu0
      %756 = vmatprep.mubr.bf16.mxu0 0
      %757 = vmatmul.mubr.bf16.gmra.mrb[0].mxu0 %v603
      %v758 = vpop.f32.mrb[0].mxu0
      %v759 = vadd.f32 0.0, %v758
      %v760 = vpop.f32.mrb[0].mxu0
      %v761 = vpop.f32.mrb[0].mxu0
      %v762 = vadd.f32 0.0, %v761
      %v763 = vpop.f32.mrb[0].mxu0
      %764 = vdwg.mxu0
      %v765 = vmax.f32 %v703, 0.0
      %v766 = vmax.f32 %v706, 0.0
      %v767 = vmax.f32 %v711, 0.0
      %v768 = vmax.f32 %v714, 0.0
      %v769 = vmax.f32 %v719, 0.0
      %v770 = vmax.f32 %v722, 0.0
      %v771 = vmax.f32 %v727, 0.0
      %v772 = vmax.f32 %v730, 0.0
      %v773 = vmax.f32 %v735, 0.0
      %v774 = vmax.f32 %v738, 0.0
      %v775 = vmax.f32 %v743, 0.0
      %v776 = vmax.f32 %v746, 0.0
      %v777 = vmax.f32 %v751, 0.0
      %v778 = vmax.f32 %v754, 0.0
      %v779 = vmax.f32 %v759, 0.0
      %v780 = vmax.f32 %v762, 0.0
      %v781 = vpack.c.bf16 %v766, %v765
      %v782 = vpack.c.bf16 %v768, %v767
      %v783 = vpack.c.bf16 %v770, %v769
      %v784 = vpack.c.bf16 %v772, %v771
      %v785 = vpack.c.bf16 %v774, %v773
      %v786 = vpack.c.bf16 %v776, %v775
      %v787 = vpack.c.bf16 %v778, %v777
      %v788 = vpack.c.bf16 %v780, %v779
      %v797 = vunpack.c.l.b16 %v781
      %v798 = vunpack.c.h.b16 %v781
      %v799 = vunpack.c.l.b16 %v782
      %v800 = vunpack.c.h.b16 %v782
      %v801 = vunpack.c.l.b16 %v783
      %v802 = vunpack.c.h.b16 %v783
      %v803 = vunpack.c.l.b16 %v784
      %v804 = vunpack.c.h.b16 %v784
      %v805 = vunpack.c.l.b16 %v785
      %v806 = vunpack.c.h.b16 %v785
      %v807 = vunpack.c.l.b16 %v786
      %v808 = vunpack.c.h.b16 %v786
      %v809 = vunpack.c.l.b16 %v787
      %v810 = vunpack.c.h.b16 %v787
      %v811 = vunpack.c.l.b16 %v788
      %v812 = vunpack.c.h.b16 %v788
      %v813 = vpack.c.b16 %v797, %v797
      %v814 = vpack.c.b16 %v798, %v798
      %v815 = vpack.c.b16 %v799, %v799
      %v816 = vpack.c.b16 %v800, %v800
      %v817 = vpack.c.b16 %v801, %v801
      %v818 = vpack.c.b16 %v802, %v802
      %v819 = vpack.c.b16 %v803, %v803
      %v820 = vpack.c.b16 %v804, %v804
      %v821 = vpack.c.b16 %v805, %v805
      %v822 = vpack.c.b16 %v806, %v806
      %v823 = vpack.c.b16 %v807, %v807
      %v824 = vpack.c.b16 %v808, %v808
      %v825 = vpack.c.b16 %v809, %v809
      %v826 = vpack.c.b16 %v810, %v810
      %v827 = vpack.c.b16 %v811, %v811
      %v828 = vpack.c.b16 %v812, %v812
      %845 = vst [vmem:[%s224] sm:$0xf] %v813
      %846 = vst [vmem:[%s224 + $0x4] sm:$0xf] %v814
      %847 = vst [vmem:[%s224 + $0x8] sm:$0xf] %v815
      %848 = vst [vmem:[%s224 + $0xc] sm:$0xf] %v816
      %849 = vst [vmem:[%s224 + $0x10] sm:$0xf] %v817
      %850 = vst [vmem:[%s224 + $0x14] sm:$0xf] %v818
      %851 = vst [vmem:[%s224 + $0x18] sm:$0xf] %v819
      %852 = vst [vmem:[%s224 + $0x1c] sm:$0xf] %v820
      %853 = vst [vmem:[%s224 + $0x20] sm:$0xf] %v821
      %854 = vst [vmem:[%s224 + $0x24] sm:$0xf] %v822
      %855 = vst [vmem:[%s224 + $0x28] sm:$0xf] %v823
      %856 = vst [vmem:[%s224 + $0x2c] sm:$0xf] %v824
      %857 = vst [vmem:[%s224 + $0x30] sm:$0xf] %v825
      %858 = vst [vmem:[%s224 + $0x34] sm:$0xf] %v826
      %859 = vst [vmem:[%s224 + $0x38] sm:$0xf] %v827
      %860 = vst [vmem:[%s224 + $0x3c] sm:$0xf] %v828
      %s861 = smul.u32 16, %s15
      %p862 = scmp.lt.s32.totalorder %s861, 31
      %s863 = scalar_select %p862, %s861, 31
      %s864 = smul.addr %s863, 4
      %s865 = scalar_lea.vmem %s4, %s864
      // Predicated region
      $region37: #{gcnii_forward_pallas.6} parent=35 // pred_check
        %p866 = pneg %p127
      $region38: #{gcnii_forward_pallas.6} parent=35 // pred_check_branch
        %868 = sbr.rel (%p866) target = $region40
      $region39: #{gcnii_forward_pallas.6} parent=35 // pred_region
        %s869 = smul.u32 16, %s15
      $region40: #{gcnii_forward_pallas.6} parent=35 // pred_fallthru
        _
    $region36: #{gcnii_forward_pallas.6} parent=5 // pred_fallthru
      _
    %p870 = scmp.le.s32.totalorder 2, %s10
    // Predicated region
    $region41: #{gcnii_forward_pallas.6} parent=5 // pred_check
      %p871 = pneg %p870
    $region42: #{gcnii_forward_pallas.6} parent=5 // pred_check_branch
      %873 = sbr.rel (%p871) target = $region44
    $region43: #{gcnii_forward_pallas.6} parent=5 // pred_region
      %s874 = ssub.s32 %s10, 2
      // Predicated region
      $region45: #{gcnii_forward_pallas.6} parent=43 // pred_check
        %p875 = pneg %p133
      $region46: #{gcnii_forward_pallas.6} parent=43 // pred_check_branch
        %877 = sbr.rel (%p875) target = $region48
      $region47: #{gcnii_forward_pallas.6} parent=43 // pred_region
        %s878 = smul.u32 16, %s16
        %p879 = scmp.lt.s32.totalorder %s878, 31
        %s880 = scalar_select %p879, %s878, 31
        %s881 = smul.addr %s880, 4
        %s882 = scalar_lea.vmem %s4, %s881
      $region48: #{gcnii_forward_pallas.6} parent=43 // pred_fallthru
        _
    $region44: #{gcnii_forward_pallas.6} parent=5 // pred_fallthru
      _
  $region6: #{gcnii_forward_pallas.6} parent=0 // loop_footer
    %s14 = sadd.s32 1, %s10
  $region7: #{gcnii_forward_pallas.6} parent=0 // loop_footer_branch
    %9 = sbr.rel target = $region3
  $region8: #{gcnii_forward_pallas.6} parent=0 // loop_exit
    _

</llo_original>
